<compile_context>
chip_gen: v7x
topology: tpu7x:2x2x1
jax: 0.10.0
libtpu: 0.0.40
codegen_flags: <defaults>
</compile_context>

<pallas_src>
import jax
import jax.numpy as jnp
from jax.experimental import pallas as pl
from jax.experimental.pallas import tpu as pltpu


def motion_encoder_kernel(x_ref, wfm_ref, bfm_ref, wdn_ref, bdn_ref,
                          out_ref, e_scr, o_scr):
    bf16 = jnp.bfloat16
    BT, Cin, L = x_ref.shape
    H = wdn_ref.shape[2]

    # ---- feature_map: fused 1x1 conv + gate (composed weights), channels-last.
    #      The NCL -> NLC rearrangement of the tiny (Cin=6) input happens here in
    #      VMEM instead of as a full HBM round trip in the wrapper.
    x_cl = jnp.transpose(x_ref[...], (0, 2, 1))                       # (BT, L, Cin) f32
    x2 = x_cl.astype(bf16).reshape(BT * L, Cin)
    cg = jnp.dot(x2, wfm_ref[...],
                 preferred_element_type=jnp.float32) + bfm_ref[...]   # (BT*L, 2H) f32
    h = cg[:, :H] * jax.nn.sigmoid(cg[:, H:])                         # (BT*L, H) f32
    # LeakyReLU(slope=1.0) == identity; Dropout == identity at inference.

    # ---- stage h de-interleaved: e_scr[i] = h[2i] (+ trailing zero pad row),
    #      o_scr[0] = 0 pad, o_scr[i+1] = h[2i+1].  With this layout every tap of
    #      the k=4 / s=2 / pad=1 conv and the avg-pool skip are contiguous
    #      unit-stride sublane loads (no strided ref access, no lane concat).
    zrow = jnp.zeros((BT, 1, H), jnp.float32)

    def stage(h_flat, length):
        half = length // 2
        hp = h_flat.reshape(BT, half, 2, H)
        e_scr[:, 0:half, :] = hp[:, :, 0, :]
        e_scr[:, half:half + 1, :] = zrow           # zero pad for the h[2t+2] tap
        o_scr[:, 1:half + 1, :] = hp[:, :, 1, :]

    o_scr[:, 0:1, :] = zrow                          # leading zero pad, never overwritten
    stage(h, L)

    # ---- three gated, residual, stride-2 downsampling blocks --------------------
    Lc = L
    for layer in range(3):
        Lo = Lc // 2
        # conv taps: out[t] = W0 h[2t-1] + W1 h[2t] + W2 h[2t+1] + W3 h[2t+2]
        v1f = e_scr[:, 0:Lo, :].reshape(BT * Lo, H)                   # h[2t]     (f32)
        v2f = o_scr[:, 1:Lo + 1, :].reshape(BT * Lo, H)               # h[2t+1]   (f32)
        v0 = o_scr[:, 0:Lo, :].reshape(BT * Lo, H).astype(bf16)       # h[2t-1]
        v3 = e_scr[:, 1:Lo + 1, :].reshape(BT * Lo, H).astype(bf16)   # h[2t+2]
        # One composed (H, 2H) bf16 matmul per tap, accumulated in f32:
        # columns 0:H = conv, columns H:2H = gate pre-activation (conv @ Wg folded in).
        acc = (jnp.dot(v0, wdn_ref[layer, 0], preferred_element_type=jnp.float32)
               + jnp.dot(v1f.astype(bf16), wdn_ref[layer, 1],
                         preferred_element_type=jnp.float32)
               + jnp.dot(v2f.astype(bf16), wdn_ref[layer, 2],
                         preferred_element_type=jnp.float32)
               + jnp.dot(v3, wdn_ref[layer, 3],
                         preferred_element_type=jnp.float32)
               + bdn_ref[layer])                                      # (BT*Lo, 2H) f32
        skip = 0.5 * (v1f + v2f)                     # avg_pool1d(h, 2, 2) residual (f32)
        h = acc[:, :H] * jax.nn.sigmoid(acc[:, H:]) + skip            # (BT*Lo, H) f32
        # LeakyReLU(slope=1.0) == identity; Dropout == identity at inference.

        if layer < 2:
            stage(h, Lo)
        else:
            # Write NCL directly: tiny (Lo, H) -> (H, Lo) in-kernel transpose so the
            # wrapper needs no output transpose (no extra HBM round trip).
            out_ref[...] = jnp.transpose(h.reshape(BT, Lo, H),
                                         (0, 2, 1)).astype(out_ref.dtype)
        Lc = Lo


def motion_encoder(x_ncl, params, *, block_b=None):
    """x_ncl: (B, Cin, L) float32, PyTorch NCL layout. Returns (B, H, L // 8) float32."""
    B, Cin, L = x_ncl.shape
    H = params["w_fm"].shape[1]
    assert L % 8 == 0, "sequence length must be divisible by 8 (three stride-2 stages)"
    Lf = L // 8

    if block_b is None:
        # grid of 2 keeps both v7x TensorCores busy; on v5e/v6e (1 TC) prefer
        # block_b = B (grid of 1) so each step carries the largest matmul M.
        block_b = B // 2 if (B >= 2 and B % 2 == 0) else B
    assert B % block_b == 0
    grid_b = B // block_b

    f32, bf16 = jnp.float32, jnp.bfloat16
    # ---- pre-compose the gate 1x1 convs into their parent matmuls (compose in
    #      f32, single bf16 cast).  In production these are computed once & cached.
    w_fm, b_fm = params["w_fm"].astype(f32), params["b_fm"].astype(f32)
    w_g0, b_g0 = params["w_g0"].astype(f32), params["b_g0"].astype(f32)
    w_fm_c = jnp.concatenate([w_fm, w_fm @ w_g0], axis=1).astype(bf16)         # (Cin, 2H)
    b_fm_c = jnp.concatenate([b_fm, b_fm @ w_g0 + b_g0], axis=1)               # (1, 2H) f32

    w_dc, b_dc = params["w_dc"].astype(f32), params["b_dc"].astype(f32)        # (3,4,H,H) / (3,1,H)
    w_dg, b_dg = params["w_dg"].astype(f32), params["b_dg"].astype(f32)        # (3,H,H)   / (3,1,H)
    w_dn_c = jnp.concatenate(
        [w_dc, jnp.einsum("ljio,lop->ljip", w_dc, w_dg)], axis=-1).astype(bf16)  # (3,4,H,2H)
    b_dn_c = jnp.concatenate(
        [b_dc, jnp.einsum("lio,lop->lip", b_dc, w_dg) + b_dg], axis=-1)           # (3,1,2H) f32

    out = pl.pallas_call(
        motion_encoder_kernel,
        out_shape=jax.ShapeDtypeStruct((B, H, Lf), jnp.float32),
        grid_spec=pltpu.PrefetchScalarGridSpec(
            num_scalar_prefetch=0,
            grid=(grid_b,),
            in_specs=[
                pl.BlockSpec((block_b, Cin, L), lambda b: (b, 0, 0)),    # x, native NCL, f32
                pl.BlockSpec((Cin, 2 * H), lambda b: (0, 0)),            # composed feature_map W
                pl.BlockSpec((1, 2 * H), lambda b: (0, 0)),              # composed feature_map b
                pl.BlockSpec((3, 4, H, 2 * H), lambda b: (0, 0, 0, 0)),  # composed down-conv W
                pl.BlockSpec((3, 1, 2 * H), lambda b: (0, 0, 0)),        # composed down-conv b
                # TODO(synk): at production H, single-buffer the grid-invariant weight
                # inputs (pipeline_mode=pl.Buffered(1)) to recover VMEM headroom on
                # v7x (64 MiB physical).
            ],
            out_specs=pl.BlockSpec((block_b, H, Lf), lambda b: (b, 0, 0)),
            scratch_shapes=[
                # Even / odd de-interleaved h (+1 zero pad row each).  Kept f32 here;
                # TODO(synk): switch to bf16 at production L (halves scratch VMEM and
                # tap-load traffic) once packed row-offset-1 bf16 stores are validated.
                pltpu.VMEM((block_b, L // 2 + 1, H), jnp.float32),
                pltpu.VMEM((block_b, L // 2 + 1, H), jnp.float32),
            ]),
        compiler_params=pltpu.CompilerParams(
            dimension_semantics=("parallel",),
            # Tiny at these test sizes; an explicit budget matters at production
            # block_b*L on v7x (64 MiB physical VMEM).
            vmem_limit_bytes=32 * 1024 * 1024,
        ),
    )(x_ncl, w_fm_c, b_fm_c, w_dn_c, b_dn_c)
    return out                                         # already NCL (B, H, L//8)


def motion_encoder_reference(x_ncl, p):
    """Plain-JAX f32 reference implementing the original (uncomposed) module math."""
    x = jnp.transpose(x_ncl, (0, 2, 1)).astype(jnp.float32)           # (B, L, Cin)
    f = x @ p["w_fm"] + p["b_fm"]
    h = f * jax.nn.sigmoid(f @ p["w_g0"] + p["b_g0"])
    for l in range(3):
        Lo = h.shape[1] // 2
        hp = jnp.pad(h, ((0, 0), (1, 1), (0, 0)))
        conv = sum(jnp.einsum("blh,ho->blo", hp[:, j:j + 2 * Lo:2, :], p["w_dc"][l, j])
                   for j in range(4)) + p["b_dc"][l]
        gate = jax.nn.sigmoid(jnp.einsum("blh,ho->blo", conv, p["w_dg"][l]) + p["b_dg"][l])
        skip = 0.5 * (h[:, 0::2, :] + h[:, 1::2, :])
        h = conv * gate + skip
    return jnp.transpose(h, (0, 2, 1))


def make_params(key, in_dim, num_hiddens):
    ks = jax.random.split(key, 8)
    s = 0.1
    return {
        "w_fm": s * jax.random.normal(ks[0], (in_dim, num_hiddens), jnp.float32),
        "b_fm": s * jax.random.normal(ks[1], (1, num_hiddens), jnp.float32),
        "w_g0": s * jax.random.normal(ks[2], (num_hiddens, num_hiddens), jnp.float32),
        "b_g0": s * jax.random.normal(ks[3], (1, num_hiddens), jnp.float32),
        "w_dc": s * jax.random.normal(ks[4], (3, 4, num_hiddens, num_hiddens), jnp.float32),
        "b_dc": s * jax.random.normal(ks[5], (3, 1, num_hiddens), jnp.float32),
        "w_dg": s * jax.random.normal(ks[6], (3, num_hiddens, num_hiddens), jnp.float32),
        "b_dg": s * jax.random.normal(ks[7], (3, 1, num_hiddens), jnp.float32),
    }


if __name__ == "__main__":
    B, IN_DIM, L = 8, 6, 16          # NCL input; L divisible by 8; grid = (2,)
    NUM_HIDDENS = 32                 # num_residual_* unused in this forward pass

    root = jax.random.PRNGKey(0)
    k_x, k_p = jax.random.split(root)
    x = jax.random.normal(k_x, (B, IN_DIM, L), jnp.float32)   # PyTorch NCL layout
    params = make_params(k_p, IN_DIM, NUM_HIDDENS)

    out = jax.block_until_ready(motion_encoder(x, params))
    ref = jax.block_until_ready(motion_encoder_reference(x, params))

    assert out.shape == (B, NUM_HIDDENS, L // 8), out.shape
    max_err = float(jnp.max(jnp.abs(out - ref)))
    assert jnp.allclose(out, ref, rtol=1e-2, atol=1e-2), f"max_err={max_err}"
    print("KERNEL_OK")
</pallas_src>

<mosaic_0001>
module attributes {stable_mosaic.version = 11 : i64} {
  func.func @motion_encoder_kernel(%arg0: i32, %arg1: memref<4x6x16xf32, #tpu.memory_space<vmem>>, %arg2: memref<6x64xbf16, #tpu.memory_space<vmem>>, %arg3: memref<1x64xf32, #tpu.memory_space<vmem>>, %arg4: memref<3x4x32x64xbf16, #tpu.memory_space<vmem>>, %arg5: memref<3x1x64xf32, #tpu.memory_space<vmem>>, %arg6: memref<4x32x2xf32, #tpu.memory_space<vmem>>, %arg7: memref<4x9x32xf32, #tpu.memory_space<vmem>>, %arg8: memref<4x9x32xf32, #tpu.memory_space<vmem>>) attributes {dimension_semantics = [#tpu.dimension_semantics<parallel>], iteration_bounds = array<i64: 2>, scalar_prefetch = 0 : i64, scratch_operands = 2 : i64, tpu.core_type = #tpu.core_type<tc>, window_params = [{transform_indices = @transform_0, window_bounds = array<i64: 4, 6, 16>}, {pipeline_mode = #tpu.pipeline_mode<synchronous>, transform_indices = @transform_1, window_bounds = array<i64: 6, 64>}, {pipeline_mode = #tpu.pipeline_mode<synchronous>, transform_indices = @transform_2, window_bounds = array<i64: 1, 64>}, {pipeline_mode = #tpu.pipeline_mode<synchronous>, transform_indices = @transform_3, window_bounds = array<i64: 3, 4, 32, 64>}, {pipeline_mode = #tpu.pipeline_mode<synchronous>, transform_indices = @transform_4, window_bounds = array<i64: 3, 1, 64>}, {transform_indices = @transform_5, window_bounds = array<i64: 4, 32, 2>}]} {
    %c0 = arith.constant 0 : index
    %c0_0 = arith.constant 0 : index
    %c0_1 = arith.constant 0 : index
    %0 = vector.load %arg1[%c0, %c0_0, %c0_1] : memref<4x6x16xf32, #tpu.memory_space<vmem>>, vector<4x6x16xf32>
    %1 = tpu.transpose %0, [0, 2, 1] : vector<4x6x16xf32> -> vector<4x16x6xf32>
    %2 = arith.truncf %1 : vector<4x16x6xf32> to vector<4x16x6xbf16>
    %3 = vector.shape_cast %2 : vector<4x16x6xbf16> to vector<64x6xbf16>
    %c0_2 = arith.constant 0 : index
    %c0_3 = arith.constant 0 : index
    %4 = vector.load %arg2[%c0_2, %c0_3] : memref<6x64xbf16, #tpu.memory_space<vmem>>, vector<6x64xbf16>
    %cst = arith.constant dense<0.000000e+00> : vector<64x64xf32>
    %5 = tpu.matmul %3, %4, %cst {dimension_numbers = #tpu.dot_dimension_numbers<[1], [0], [0], [1], [0, 0, 1, 1], [], []>} : vector<64x6xbf16>, vector<6x64xbf16>, vector<64x64xf32> -> vector<64x64xf32>
    %c0_4 = arith.constant 0 : index
    %c0_5 = arith.constant 0 : index
    %6 = vector.load %arg3[%c0_4, %c0_5] : memref<1x64xf32, #tpu.memory_space<vmem>>, vector<1x64xf32>
    %7 = vector.broadcast %6 : vector<1x64xf32> to vector<64x64xf32>
    %8 = arith.addf %5, %7 : vector<64x64xf32>
    %9 = vector.extract_strided_slice %8 {offsets = [0, 0], sizes = [64, 32], strides = [1, 1]} : vector<64x64xf32> to vector<64x32xf32>
    %10 = vector.extract_strided_slice %8 {offsets = [0, 32], sizes = [64, 32], strides = [1, 1]} : vector<64x64xf32> to vector<64x32xf32>
    %11 = arith.negf %10 : vector<64x32xf32>
    %12 = math.exp %11 : vector<64x32xf32>
    %cst_6 = arith.constant 1.000000e+00 : f32
    %13 = vector.broadcast %cst_6 : f32 to vector<64x32xf32>
    %14 = arith.addf %13, %12 : vector<64x32xf32>
    %15 = arith.divf %13, %14 : vector<64x32xf32>
    %16 = arith.mulf %9, %15 : vector<64x32xf32>
    %cst_7 = arith.constant 0.000000e+00 : f32
    %17 = vector.broadcast %cst_7 : f32 to vector<4x1x32xf32>
    %c0_8 = arith.constant 0 : index
    %c0_9 = arith.constant 0 : index
    %c0_10 = arith.constant 0 : index
    %18 = vector.load %arg8[%c0_8, %c0_9, %c0_10] : memref<4x9x32xf32, #tpu.memory_space<vmem>>, vector<4x1x32xf32>
    tpu.vector_store %arg8[%c0_8, %c0_9, %c0_10], %17 {strides = array<i32>} : memref<4x9x32xf32, #tpu.memory_space<vmem>>, vector<4x1x32xf32>,
    %19 = vector.shape_cast %16 : vector<64x32xf32> to vector<4x8x2x32xf32>
    %20 = vector.extract_strided_slice %19 {offsets = [0, 0, 0, 0], sizes = [4, 8, 1, 32], strides = [1, 1, 1, 1]} : vector<4x8x2x32xf32> to vector<4x8x1x32xf32>
    %21 = vector.shape_cast %20 : vector<4x8x1x32xf32> to vector<4x8x32xf32>
    %c0_11 = arith.constant 0 : index
    %c0_12 = arith.constant 0 : index
    %c0_13 = arith.constant 0 : index
    %22 = vector.load %arg7[%c0_11, %c0_12, %c0_13] : memref<4x9x32xf32, #tpu.memory_space<vmem>>, vector<4x8x32xf32>
    tpu.vector_store %arg7[%c0_11, %c0_12, %c0_13], %21 {strides = array<i32>} : memref<4x9x32xf32, #tpu.memory_space<vmem>>, vector<4x8x32xf32>,
    %c0_14 = arith.constant 0 : index
    %c8 = arith.constant 8 : index
    %c0_15 = arith.constant 0 : index
    %23 = vector.load %arg7[%c0_14, %c8, %c0_15] : memref<4x9x32xf32, #tpu.memory_space<vmem>>, vector<4x1x32xf32>
    tpu.vector_store %arg7[%c0_14, %c8, %c0_15], %17 {strides = array<i32>} : memref<4x9x32xf32, #tpu.memory_space<vmem>>, vector<4x1x32xf32>,
    %24 = vector.extract_strided_slice %19 {offsets = [0, 0, 1, 0], sizes = [4, 8, 1, 32], strides = [1, 1, 1, 1]} : vector<4x8x2x32xf32> to vector<4x8x1x32xf32>
    %25 = vector.shape_cast %24 : vector<4x8x1x32xf32> to vector<4x8x32xf32>
    %c0_16 = arith.constant 0 : index
    %c1 = arith.constant 1 : index
    %c0_17 = arith.constant 0 : index
    %26 = vector.load %arg8[%c0_16, %c1, %c0_17] : memref<4x9x32xf32, #tpu.memory_space<vmem>>, vector<4x8x32xf32>
    tpu.vector_store %arg8[%c0_16, %c1, %c0_17], %25 {strides = array<i32>} : memref<4x9x32xf32, #tpu.memory_space<vmem>>, vector<4x8x32xf32>,
    %c0_18 = arith.constant 0 : index
    %c0_19 = arith.constant 0 : index
    %c0_20 = arith.constant 0 : index
    %27 = vector.load %arg7[%c0_18, %c0_19, %c0_20] : memref<4x9x32xf32, #tpu.memory_space<vmem>>, vector<4x8x32xf32>
    %28 = vector.shape_cast %27 : vector<4x8x32xf32> to vector<32x32xf32>
    %c0_21 = arith.constant 0 : index
    %c1_22 = arith.constant 1 : index
    %c0_23 = arith.constant 0 : index
    %29 = vector.load %arg8[%c0_21, %c1_22, %c0_23] : memref<4x9x32xf32, #tpu.memory_space<vmem>>, vector<4x8x32xf32>
    %30 = vector.shape_cast %29 : vector<4x8x32xf32> to vector<32x32xf32>
    %c0_24 = arith.constant 0 : index
    %c0_25 = arith.constant 0 : index
    %c0_26 = arith.constant 0 : index
    %31 = vector.load %arg8[%c0_24, %c0_25, %c0_26] : memref<4x9x32xf32, #tpu.memory_space<vmem>>, vector<4x8x32xf32>
    %32 = vector.shape_cast %31 : vector<4x8x32xf32> to vector<32x32xf32>
    %33 = arith.truncf %32 : vector<32x32xf32> to vector<32x32xbf16>
    %c0_27 = arith.constant 0 : index
    %c1_28 = arith.constant 1 : index
    %c0_29 = arith.constant 0 : index
    %34 = vector.load %arg7[%c0_27, %c1_28, %c0_29] : memref<4x9x32xf32, #tpu.memory_space<vmem>>, vector<4x8x32xf32>
    %35 = vector.shape_cast %34 : vector<4x8x32xf32> to vector<32x32xf32>
    %36 = arith.truncf %35 : vector<32x32xf32> to vector<32x32xbf16>
    %c0_30 = arith.constant 0 : index
    %c0_31 = arith.constant 0 : index
    %c0_32 = arith.constant 0 : index
    %c0_33 = arith.constant 0 : index
    %37 = vector.load %arg4[%c0_30, %c0_31, %c0_32, %c0_33] : memref<3x4x32x64xbf16, #tpu.memory_space<vmem>>, vector<1x1x32x64xbf16>
    %38 = vector.shape_cast %37 : vector<1x1x32x64xbf16> to vector<32x64xbf16>
    %cst_34 = arith.constant dense<0.000000e+00> : vector<32x64xf32>
    %39 = tpu.matmul %33, %38, %cst_34 {dimension_numbers = #tpu.dot_dimension_numbers<[1], [0], [0], [1], [0, 0, 1, 1], [], []>} : vector<32x32xbf16>, vector<32x64xbf16>, vector<32x64xf32> -> vector<32x64xf32>
    %40 = arith.truncf %28 : vector<32x32xf32> to vector<32x32xbf16>
    %c0_35 = arith.constant 0 : index
    %c1_36 = arith.constant 1 : index
    %c0_37 = arith.constant 0 : index
    %c0_38 = arith.constant 0 : index
    %41 = vector.load %arg4[%c0_35, %c1_36, %c0_37, %c0_38] : memref<3x4x32x64xbf16, #tpu.memory_space<vmem>>, vector<1x1x32x64xbf16>
    %42 = vector.shape_cast %41 : vector<1x1x32x64xbf16> to vector<32x64xbf16>
    %cst_39 = arith.constant dense<0.000000e+00> : vector<32x64xf32>
    %43 = tpu.matmul %40, %42, %cst_39 {dimension_numbers = #tpu.dot_dimension_numbers<[1], [0], [0], [1], [0, 0, 1, 1], [], []>} : vector<32x32xbf16>, vector<32x64xbf16>, vector<32x64xf32> -> vector<32x64xf32>
    %44 = arith.addf %39, %43 : vector<32x64xf32>
    %45 = arith.truncf %30 : vector<32x32xf32> to vector<32x32xbf16>
    %c0_40 = arith.constant 0 : index
    %c2 = arith.constant 2 : index
    %c0_41 = arith.constant 0 : index
    %c0_42 = arith.constant 0 : index
    %46 = vector.load %arg4[%c0_40, %c2, %c0_41, %c0_42] : memref<3x4x32x64xbf16, #tpu.memory_space<vmem>>, vector<1x1x32x64xbf16>
    %47 = vector.shape_cast %46 : vector<1x1x32x64xbf16> to vector<32x64xbf16>
    %cst_43 = arith.constant dense<0.000000e+00> : vector<32x64xf32>
    %48 = tpu.matmul %45, %47, %cst_43 {dimension_numbers = #tpu.dot_dimension_numbers<[1], [0], [0], [1], [0, 0, 1, 1], [], []>} : vector<32x32xbf16>, vector<32x64xbf16>, vector<32x64xf32> -> vector<32x64xf32>
    %49 = arith.addf %44, %48 : vector<32x64xf32>
    %c0_44 = arith.constant 0 : index
    %c3 = arith.constant 3 : index
    %c0_45 = arith.constant 0 : index
    %c0_46 = arith.constant 0 : index
    %50 = vector.load %arg4[%c0_44, %c3, %c0_45, %c0_46] : memref<3x4x32x64xbf16, #tpu.memory_space<vmem>>, vector<1x1x32x64xbf16>
    %51 = vector.shape_cast %50 : vector<1x1x32x64xbf16> to vector<32x64xbf16>
    %cst_47 = arith.constant dense<0.000000e+00> : vector<32x64xf32>
    %52 = tpu.matmul %36, %51, %cst_47 {dimension_numbers = #tpu.dot_dimension_numbers<[1], [0], [0], [1], [0, 0, 1, 1], [], []>} : vector<32x32xbf16>, vector<32x64xbf16>, vector<32x64xf32> -> vector<32x64xf32>
    %53 = arith.addf %49, %52 : vector<32x64xf32>
    %c0_48 = arith.constant 0 : index
    %c0_49 = arith.constant 0 : index
    %c0_50 = arith.constant 0 : index
    %54 = vector.load %arg5[%c0_48, %c0_49, %c0_50] : memref<3x1x64xf32, #tpu.memory_space<vmem>>, vector<1x1x64xf32>
    %55 = vector.shape_cast %54 : vector<1x1x64xf32> to vector<1x64xf32>
    %56 = vector.broadcast %55 : vector<1x64xf32> to vector<32x64xf32>
    %57 = arith.addf %53, %56 : vector<32x64xf32>
    %58 = arith.addf %28, %30 : vector<32x32xf32>
    %cst_51 = arith.constant 5.000000e-01 : f32
    %59 = vector.broadcast %cst_51 : f32 to vector<32x32xf32>
    %60 = arith.mulf %59, %58 : vector<32x32xf32>
    %61 = vector.extract_strided_slice %57 {offsets = [0, 0], sizes = [32, 32], strides = [1, 1]} : vector<32x64xf32> to vector<32x32xf32>
    %62 = vector.extract_strided_slice %57 {offsets = [0, 32], sizes = [32, 32], strides = [1, 1]} : vector<32x64xf32> to vector<32x32xf32>
    %63 = arith.negf %62 : vector<32x32xf32>
    %64 = math.exp %63 : vector<32x32xf32>
    %cst_52 = arith.constant 1.000000e+00 : f32
    %65 = vector.broadcast %cst_52 : f32 to vector<32x32xf32>
    %66 = arith.addf %65, %64 : vector<32x32xf32>
    %67 = arith.divf %65, %66 : vector<32x32xf32>
    %68 = arith.mulf %61, %67 : vector<32x32xf32>
    %69 = arith.addf %68, %60 : vector<32x32xf32>
    %70 = vector.shape_cast %69 : vector<32x32xf32> to vector<4x4x2x32xf32>
    %71 = vector.extract_strided_slice %70 {offsets = [0, 0, 0, 0], sizes = [4, 4, 1, 32], strides = [1, 1, 1, 1]} : vector<4x4x2x32xf32> to vector<4x4x1x32xf32>
    %72 = vector.shape_cast %71 : vector<4x4x1x32xf32> to vector<4x4x32xf32>
    %c0_53 = arith.constant 0 : index
    %c0_54 = arith.constant 0 : index
    %c0_55 = arith.constant 0 : index
    %73 = vector.load %arg7[%c0_53, %c0_54, %c0_55] : memref<4x9x32xf32, #tpu.memory_space<vmem>>, vector<4x4x32xf32>
    tpu.vector_store %arg7[%c0_53, %c0_54, %c0_55], %72 {strides = array<i32>} : memref<4x9x32xf32, #tpu.memory_space<vmem>>, vector<4x4x32xf32>,
    %c0_56 = arith.constant 0 : index
    %c4 = arith.constant 4 : index
    %c0_57 = arith.constant 0 : index
    %74 = vector.load %arg7[%c0_56, %c4, %c0_57] : memref<4x9x32xf32, #tpu.memory_space<vmem>>, vector<4x1x32xf32>
    tpu.vector_store %arg7[%c0_56, %c4, %c0_57], %17 {strides = array<i32>} : memref<4x9x32xf32, #tpu.memory_space<vmem>>, vector<4x1x32xf32>,
    %75 = vector.extract_strided_slice %70 {offsets = [0, 0, 1, 0], sizes = [4, 4, 1, 32], strides = [1, 1, 1, 1]} : vector<4x4x2x32xf32> to vector<4x4x1x32xf32>
    %76 = vector.shape_cast %75 : vector<4x4x1x32xf32> to vector<4x4x32xf32>
    %c0_58 = arith.constant 0 : index
    %c1_59 = arith.constant 1 : index
    %c0_60 = arith.constant 0 : index
    %77 = vector.load %arg8[%c0_58, %c1_59, %c0_60] : memref<4x9x32xf32, #tpu.memory_space<vmem>>, vector<4x4x32xf32>
    tpu.vector_store %arg8[%c0_58, %c1_59, %c0_60], %76 {strides = array<i32>} : memref<4x9x32xf32, #tpu.memory_space<vmem>>, vector<4x4x32xf32>,
    %c0_61 = arith.constant 0 : index
    %c0_62 = arith.constant 0 : index
    %c0_63 = arith.constant 0 : index
    %78 = vector.load %arg7[%c0_61, %c0_62, %c0_63] : memref<4x9x32xf32, #tpu.memory_space<vmem>>, vector<4x4x32xf32>
    %79 = vector.shape_cast %78 : vector<4x4x32xf32> to vector<16x32xf32>
    %c0_64 = arith.constant 0 : index
    %c1_65 = arith.constant 1 : index
    %c0_66 = arith.constant 0 : index
    %80 = vector.load %arg8[%c0_64, %c1_65, %c0_66] : memref<4x9x32xf32, #tpu.memory_space<vmem>>, vector<4x4x32xf32>
    %81 = vector.shape_cast %80 : vector<4x4x32xf32> to vector<16x32xf32>
    %c0_67 = arith.constant 0 : index
    %c0_68 = arith.constant 0 : index
    %c0_69 = arith.constant 0 : index
    %82 = vector.load %arg8[%c0_67, %c0_68, %c0_69] : memref<4x9x32xf32, #tpu.memory_space<vmem>>, vector<4x4x32xf32>
    %83 = vector.shape_cast %82 : vector<4x4x32xf32> to vector<16x32xf32>
    %84 = arith.truncf %83 : vector<16x32xf32> to vector<16x32xbf16>
    %c0_70 = arith.constant 0 : index
    %c1_71 = arith.constant 1 : index
    %c0_72 = arith.constant 0 : index
    %85 = vector.load %arg7[%c0_70, %c1_71, %c0_72] : memref<4x9x32xf32, #tpu.memory_space<vmem>>, vector<4x4x32xf32>
    %86 = vector.shape_cast %85 : vector<4x4x32xf32> to vector<16x32xf32>
    %87 = arith.truncf %86 : vector<16x32xf32> to vector<16x32xbf16>
    %c1_73 = arith.constant 1 : index
    %c0_74 = arith.constant 0 : index
    %c0_75 = arith.constant 0 : index
    %c0_76 = arith.constant 0 : index
    %88 = vector.load %arg4[%c1_73, %c0_74, %c0_75, %c0_76] : memref<3x4x32x64xbf16, #tpu.memory_space<vmem>>, vector<1x1x32x64xbf16>
    %89 = vector.shape_cast %88 : vector<1x1x32x64xbf16> to vector<32x64xbf16>
    %cst_77 = arith.constant dense<0.000000e+00> : vector<16x64xf32>
    %90 = tpu.matmul %84, %89, %cst_77 {dimension_numbers = #tpu.dot_dimension_numbers<[1], [0], [0], [1], [0, 0, 1, 1], [], []>} : vector<16x32xbf16>, vector<32x64xbf16>, vector<16x64xf32> -> vector<16x64xf32>
    %91 = arith.truncf %79 : vector<16x32xf32> to vector<16x32xbf16>
    %c1_78 = arith.constant 1 : index
    %c1_79 = arith.constant 1 : index
    %c0_80 = arith.constant 0 : index
    %c0_81 = arith.constant 0 : index
    %92 = vector.load %arg4[%c1_78, %c1_79, %c0_80, %c0_81] : memref<3x4x32x64xbf16, #tpu.memory_space<vmem>>, vector<1x1x32x64xbf16>
    %93 = vector.shape_cast %92 : vector<1x1x32x64xbf16> to vector<32x64xbf16>
    %cst_82 = arith.constant dense<0.000000e+00> : vector<16x64xf32>
    %94 = tpu.matmul %91, %93, %cst_82 {dimension_numbers = #tpu.dot_dimension_numbers<[1], [0], [0], [1], [0, 0, 1, 1], [], []>} : vector<16x32xbf16>, vector<32x64xbf16>, vector<16x64xf32> -> vector<16x64xf32>
    %95 = arith.addf %90, %94 : vector<16x64xf32>
    %96 = arith.truncf %81 : vector<16x32xf32> to vector<16x32xbf16>
    %c1_83 = arith.constant 1 : index
    %c2_84 = arith.constant 2 : index
    %c0_85 = arith.constant 0 : index
    %c0_86 = arith.constant 0 : index
    %97 = vector.load %arg4[%c1_83, %c2_84, %c0_85, %c0_86] : memref<3x4x32x64xbf16, #tpu.memory_space<vmem>>, vector<1x1x32x64xbf16>
    %98 = vector.shape_cast %97 : vector<1x1x32x64xbf16> to vector<32x64xbf16>
    %cst_87 = arith.constant dense<0.000000e+00> : vector<16x64xf32>
    %99 = tpu.matmul %96, %98, %cst_87 {dimension_numbers = #tpu.dot_dimension_numbers<[1], [0], [0], [1], [0, 0, 1, 1], [], []>} : vector<16x32xbf16>, vector<32x64xbf16>, vector<16x64xf32> -> vector<16x64xf32>
    %100 = arith.addf %95, %99 : vector<16x64xf32>
    %c1_88 = arith.constant 1 : index
    %c3_89 = arith.constant 3 : index
    %c0_90 = arith.constant 0 : index
    %c0_91 = arith.constant 0 : index
    %101 = vector.load %arg4[%c1_88, %c3_89, %c0_90, %c0_91] : memref<3x4x32x64xbf16, #tpu.memory_space<vmem>>, vector<1x1x32x64xbf16>
    %102 = vector.shape_cast %101 : vector<1x1x32x64xbf16> to vector<32x64xbf16>
    %cst_92 = arith.constant dense<0.000000e+00> : vector<16x64xf32>
    %103 = tpu.matmul %87, %102, %cst_92 {dimension_numbers = #tpu.dot_dimension_numbers<[1], [0], [0], [1], [0, 0, 1, 1], [], []>} : vector<16x32xbf16>, vector<32x64xbf16>, vector<16x64xf32> -> vector<16x64xf32>
    %104 = arith.addf %100, %103 : vector<16x64xf32>
    %c1_93 = arith.constant 1 : index
    %c0_94 = arith.constant 0 : index
    %c0_95 = arith.constant 0 : index
    %105 = vector.load %arg5[%c1_93, %c0_94, %c0_95] : memref<3x1x64xf32, #tpu.memory_space<vmem>>, vector<1x1x64xf32>
    %106 = vector.shape_cast %105 : vector<1x1x64xf32> to vector<1x64xf32>
    %107 = vector.broadcast %106 : vector<1x64xf32> to vector<16x64xf32>
    %108 = arith.addf %104, %107 : vector<16x64xf32>
    %109 = arith.addf %79, %81 : vector<16x32xf32>
    %cst_96 = arith.constant 5.000000e-01 : f32
    %110 = vector.broadcast %cst_96 : f32 to vector<16x32xf32>
    %111 = arith.mulf %110, %109 : vector<16x32xf32>
    %112 = vector.extract_strided_slice %108 {offsets = [0, 0], sizes = [16, 32], strides = [1, 1]} : vector<16x64xf32> to vector<16x32xf32>
    %113 = vector.extract_strided_slice %108 {offsets = [0, 32], sizes = [16, 32], strides = [1, 1]} : vector<16x64xf32> to vector<16x32xf32>
    %114 = arith.negf %113 : vector<16x32xf32>
    %115 = math.exp %114 : vector<16x32xf32>
    %cst_97 = arith.constant 1.000000e+00 : f32
    %116 = vector.broadcast %cst_97 : f32 to vector<16x32xf32>
    %117 = arith.addf %116, %115 : vector<16x32xf32>
    %118 = arith.divf %116, %117 : vector<16x32xf32>
    %119 = arith.mulf %112, %118 : vector<16x32xf32>
    %120 = arith.addf %119, %111 : vector<16x32xf32>
    %121 = vector.shape_cast %120 : vector<16x32xf32> to vector<4x2x2x32xf32>
    %122 = vector.extract_strided_slice %121 {offsets = [0, 0, 0, 0], sizes = [4, 2, 1, 32], strides = [1, 1, 1, 1]} : vector<4x2x2x32xf32> to vector<4x2x1x32xf32>
    %123 = vector.shape_cast %122 : vector<4x2x1x32xf32> to vector<4x2x32xf32>
    %c0_98 = arith.constant 0 : index
    %c0_99 = arith.constant 0 : index
    %c0_100 = arith.constant 0 : index
    %124 = vector.load %arg7[%c0_98, %c0_99, %c0_100] : memref<4x9x32xf32, #tpu.memory_space<vmem>>, vector<4x2x32xf32>
    tpu.vector_store %arg7[%c0_98, %c0_99, %c0_100], %123 {strides = array<i32>} : memref<4x9x32xf32, #tpu.memory_space<vmem>>, vector<4x2x32xf32>,
    %c0_101 = arith.constant 0 : index
    %c2_102 = arith.constant 2 : index
    %c0_103 = arith.constant 0 : index
    %125 = vector.load %arg7[%c0_101, %c2_102, %c0_103] : memref<4x9x32xf32, #tpu.memory_space<vmem>>, vector<4x1x32xf32>
    tpu.vector_store %arg7[%c0_101, %c2_102, %c0_103], %17 {strides = array<i32>} : memref<4x9x32xf32, #tpu.memory_space<vmem>>, vector<4x1x32xf32>,
    %126 = vector.extract_strided_slice %121 {offsets = [0, 0, 1, 0], sizes = [4, 2, 1, 32], strides = [1, 1, 1, 1]} : vector<4x2x2x32xf32> to vector<4x2x1x32xf32>
    %127 = vector.shape_cast %126 : vector<4x2x1x32xf32> to vector<4x2x32xf32>
    %c0_104 = arith.constant 0 : index
    %c1_105 = arith.constant 1 : index
    %c0_106 = arith.constant 0 : index
    %128 = vector.load %arg8[%c0_104, %c1_105, %c0_106] : memref<4x9x32xf32, #tpu.memory_space<vmem>>, vector<4x2x32xf32>
    tpu.vector_store %arg8[%c0_104, %c1_105, %c0_106], %127 {strides = array<i32>} : memref<4x9x32xf32, #tpu.memory_space<vmem>>, vector<4x2x32xf32>,
    %c0_107 = arith.constant 0 : index
    %c0_108 = arith.constant 0 : index
    %c0_109 = arith.constant 0 : index
    %129 = vector.load %arg7[%c0_107, %c0_108, %c0_109] : memref<4x9x32xf32, #tpu.memory_space<vmem>>, vector<4x2x32xf32>
    %130 = vector.shape_cast %129 : vector<4x2x32xf32> to vector<8x32xf32>
    %c0_110 = arith.constant 0 : index
    %c1_111 = arith.constant 1 : index
    %c0_112 = arith.constant 0 : index
    %131 = vector.load %arg8[%c0_110, %c1_111, %c0_112] : memref<4x9x32xf32, #tpu.memory_space<vmem>>, vector<4x2x32xf32>
    %132 = vector.shape_cast %131 : vector<4x2x32xf32> to vector<8x32xf32>
    %c0_113 = arith.constant 0 : index
    %c0_114 = arith.constant 0 : index
    %c0_115 = arith.constant 0 : index
    %133 = vector.load %arg8[%c0_113, %c0_114, %c0_115] : memref<4x9x32xf32, #tpu.memory_space<vmem>>, vector<4x2x32xf32>
    %134 = vector.shape_cast %133 : vector<4x2x32xf32> to vector<8x32xf32>
    %135 = arith.truncf %134 : vector<8x32xf32> to vector<8x32xbf16>
    %c0_116 = arith.constant 0 : index
    %c1_117 = arith.constant 1 : index
    %c0_118 = arith.constant 0 : index
    %136 = vector.load %arg7[%c0_116, %c1_117, %c0_118] : memref<4x9x32xf32, #tpu.memory_space<vmem>>, vector<4x2x32xf32>
    %137 = vector.shape_cast %136 : vector<4x2x32xf32> to vector<8x32xf32>
    %138 = arith.truncf %137 : vector<8x32xf32> to vector<8x32xbf16>
    %c2_119 = arith.constant 2 : index
    %c0_120 = arith.constant 0 : index
    %c0_121 = arith.constant 0 : index
    %c0_122 = arith.constant 0 : index
    %139 = vector.load %arg4[%c2_119, %c0_120, %c0_121, %c0_122] : memref<3x4x32x64xbf16, #tpu.memory_space<vmem>>, vector<1x1x32x64xbf16>
    %140 = vector.shape_cast %139 : vector<1x1x32x64xbf16> to vector<32x64xbf16>
    %cst_123 = arith.constant dense<0.000000e+00> : vector<8x64xf32>
    %141 = tpu.matmul %135, %140, %cst_123 {dimension_numbers = #tpu.dot_dimension_numbers<[1], [0], [0], [1], [0, 0, 1, 1], [], []>} : vector<8x32xbf16>, vector<32x64xbf16>, vector<8x64xf32> -> vector<8x64xf32>
    %142 = arith.truncf %130 : vector<8x32xf32> to vector<8x32xbf16>
    %c2_124 = arith.constant 2 : index
    %c1_125 = arith.constant 1 : index
    %c0_126 = arith.constant 0 : index
    %c0_127 = arith.constant 0 : index
    %143 = vector.load %arg4[%c2_124, %c1_125, %c0_126, %c0_127] : memref<3x4x32x64xbf16, #tpu.memory_space<vmem>>, vector<1x1x32x64xbf16>
    %144 = vector.shape_cast %143 : vector<1x1x32x64xbf16> to vector<32x64xbf16>
    %cst_128 = arith.constant dense<0.000000e+00> : vector<8x64xf32>
    %145 = tpu.matmul %142, %144, %cst_128 {dimension_numbers = #tpu.dot_dimension_numbers<[1], [0], [0], [1], [0, 0, 1, 1], [], []>} : vector<8x32xbf16>, vector<32x64xbf16>, vector<8x64xf32> -> vector<8x64xf32>
    %146 = arith.addf %141, %145 : vector<8x64xf32>
    %147 = arith.truncf %132 : vector<8x32xf32> to vector<8x32xbf16>
    %c2_129 = arith.constant 2 : index
    %c2_130 = arith.constant 2 : index
    %c0_131 = arith.constant 0 : index
    %c0_132 = arith.constant 0 : index
    %148 = vector.load %arg4[%c2_129, %c2_130, %c0_131, %c0_132] : memref<3x4x32x64xbf16, #tpu.memory_space<vmem>>, vector<1x1x32x64xbf16>
    %149 = vector.shape_cast %148 : vector<1x1x32x64xbf16> to vector<32x64xbf16>
    %cst_133 = arith.constant dense<0.000000e+00> : vector<8x64xf32>
    %150 = tpu.matmul %147, %149, %cst_133 {dimension_numbers = #tpu.dot_dimension_numbers<[1], [0], [0], [1], [0, 0, 1, 1], [], []>} : vector<8x32xbf16>, vector<32x64xbf16>, vector<8x64xf32> -> vector<8x64xf32>
    %151 = arith.addf %146, %150 : vector<8x64xf32>
    %c2_134 = arith.constant 2 : index
    %c3_135 = arith.constant 3 : index
    %c0_136 = arith.constant 0 : index
    %c0_137 = arith.constant 0 : index
    %152 = vector.load %arg4[%c2_134, %c3_135, %c0_136, %c0_137] : memref<3x4x32x64xbf16, #tpu.memory_space<vmem>>, vector<1x1x32x64xbf16>
    %153 = vector.shape_cast %152 : vector<1x1x32x64xbf16> to vector<32x64xbf16>
    %cst_138 = arith.constant dense<0.000000e+00> : vector<8x64xf32>
    %154 = tpu.matmul %138, %153, %cst_138 {dimension_numbers = #tpu.dot_dimension_numbers<[1], [0], [0], [1], [0, 0, 1, 1], [], []>} : vector<8x32xbf16>, vector<32x64xbf16>, vector<8x64xf32> -> vector<8x64xf32>
    %155 = arith.addf %151, %154 : vector<8x64xf32>
    %c2_139 = arith.constant 2 : index
    %c0_140 = arith.constant 0 : index
    %c0_141 = arith.constant 0 : index
    %156 = vector.load %arg5[%c2_139, %c0_140, %c0_141] : memref<3x1x64xf32, #tpu.memory_space<vmem>>, vector<1x1x64xf32>
    %157 = vector.shape_cast %156 : vector<1x1x64xf32> to vector<1x64xf32>
    %158 = vector.broadcast %157 : vector<1x64xf32> to vector<8x64xf32>
    %159 = arith.addf %155, %158 : vector<8x64xf32>
    %160 = arith.addf %130, %132 : vector<8x32xf32>
    %cst_142 = arith.constant 5.000000e-01 : f32
    %161 = vector.broadcast %cst_142 : f32 to vector<8x32xf32>
    %162 = arith.mulf %161, %160 : vector<8x32xf32>
    %163 = vector.extract_strided_slice %159 {offsets = [0, 0], sizes = [8, 32], strides = [1, 1]} : vector<8x64xf32> to vector<8x32xf32>
    %164 = vector.extract_strided_slice %159 {offsets = [0, 32], sizes = [8, 32], strides = [1, 1]} : vector<8x64xf32> to vector<8x32xf32>
    %165 = arith.negf %164 : vector<8x32xf32>
    %166 = math.exp %165 : vector<8x32xf32>
    %cst_143 = arith.constant 1.000000e+00 : f32
    %167 = vector.broadcast %cst_143 : f32 to vector<8x32xf32>
    %168 = arith.addf %167, %166 : vector<8x32xf32>
    %169 = arith.divf %167, %168 : vector<8x32xf32>
    %170 = arith.mulf %163, %169 : vector<8x32xf32>
    %171 = arith.addf %170, %162 : vector<8x32xf32>
    %172 = vector.shape_cast %171 : vector<8x32xf32> to vector<4x2x32xf32>
    %173 = tpu.transpose %172, [0, 2, 1] : vector<4x2x32xf32> -> vector<4x32x2xf32>
    %c0_144 = arith.constant 0 : index
    %c0_145 = arith.constant 0 : index
    %c0_146 = arith.constant 0 : index
    %174 = vector.load %arg6[%c0_144, %c0_145, %c0_146] : memref<4x32x2xf32, #tpu.memory_space<vmem>>, vector<4x32x2xf32>
    tpu.vector_store %arg6[%c0_144, %c0_145, %c0_146], %173 {strides = array<i32>} : memref<4x32x2xf32, #tpu.memory_space<vmem>>, vector<4x32x2xf32>,
    return
  }
  func.func @transform_0(%arg0: i32) -> (i32, i32, i32) {
    %c0_i32 = arith.constant 0 : i32
    %c0_i32_0 = arith.constant 0 : i32
    %c0_i32_1 = arith.constant 0 : i32
    return %arg0, %c0_i32, %c0_i32_0 : i32, i32, i32
  }
  func.func @transform_1(%arg0: i32) -> (i32, i32) {
    %c0_i32 = arith.constant 0 : i32
    %c0_i32_0 = arith.constant 0 : i32
    %c0_i32_1 = arith.constant 0 : i32
    return %c0_i32, %c0_i32_0 : i32, i32
  }
  func.func @transform_2(%arg0: i32) -> (i32, i32) {
    %c0_i32 = arith.constant 0 : i32
    %c0_i32_0 = arith.constant 0 : i32
    %c0_i32_1 = arith.constant 0 : i32
    return %c0_i32, %c0_i32_0 : i32, i32
  }
  func.func @transform_3(%arg0: i32) -> (i32, i32, i32, i32) {
    %c0_i32 = arith.constant 0 : i32
    %c0_i32_0 = arith.constant 0 : i32
    %c0_i32_1 = arith.constant 0 : i32
    %c0_i32_2 = arith.constant 0 : i32
    %c0_i32_3 = arith.constant 0 : i32
    return %c0_i32, %c0_i32_0, %c0_i32_1, %c0_i32_2 : i32, i32, i32, i32
  }
  func.func @transform_4(%arg0: i32) -> (i32, i32, i32) {
    %c0_i32 = arith.constant 0 : i32
    %c0_i32_0 = arith.constant 0 : i32
    %c0_i32_1 = arith.constant 0 : i32
    %c0_i32_2 = arith.constant 0 : i32
    return %c0_i32, %c0_i32_0, %c0_i32_1 : i32, i32, i32
  }
  func.func @transform_5(%arg0: i32) -> (i32, i32, i32) {
    %c0_i32 = arith.constant 0 : i32
    %c0_i32_0 = arith.constant 0 : i32
    %c0_i32_1 = arith.constant 0 : i32
    return %arg0, %c0_i32, %c0_i32_0 : i32, i32, i32
  }
}

</mosaic_0001>

<llo_original>
// kernel: tpu_custom_call.1
$region0: #{tpu_custom_call.1}
  #allocation0 [shape = 'u32[]', space=smem, size = 0x4, offset = 0x4, fixed_abs, tag = 'smem constant byte address 0x4 - core index']
  #allocation1 [shape = 'u32[144,128]{1,0:T(1,128)}', space=vmem, size = 0x12000, scoped, tag = 'internal scratch']
  #allocation2 [shape = 'f32[4,9,32]{2,1,0:T(8,128)}', space=vmem, size = 0x8000, scoped, tag = 'scratch operand']
  #allocation3 [shape = 'f32[4,9,32]{2,1,0:T(8,128)}', space=vmem, size = 0x8000, scoped, tag = 'scratch operand']
  %s0 = inlined_call_operand.vmem [shape: f32[8,6,16], index: 0, kind: input, shape index: {}]
  %s1 = inlined_call_operand.vmem [shape: bf16[6,64], index: 1, kind: input, shape index: {}]
  %s2 = inlined_call_operand.vmem [shape: f32[1,64], index: 2, kind: input, shape index: {}]
  %s3 = inlined_call_operand.hbm [shape: bf16[3,4,32,64], index: 3, kind: input, shape index: {}]
  %s4 = inlined_call_operand.vmem [shape: f32[3,1,64], index: 4, kind: input, shape index: {}]
  %s5 = inlined_call_operand.vmem [shape: f32[8,32,2], index: 5, kind: output, shape index: {}]
  %s6 = sld [smem:[#allocation0]]
  $region57: #{tpu_custom_call.1} parent=0
    _
  %s8 = ssub.s32 1, %s6
  %s9 = scalar_select 0, %s8, %s6
  $region1: #{tpu_custom_call.1} parent=0
    #allocation4 [shape = 'u8[98304]{0}', space=vmem, size = 0x18000, scoped, tag = 'input window, operand 3, single buffered']
    #allocation5 [shape = 's32[2]{0}', space=sflag, size = 0x8, scoped, tag = 'scoped memory for tpu_custom_call.1']
    %10 = vsyncpa [#allocation5], 0
    loop: start=0, step=1, limit=4
    $region2: #{tpu_custom_call.1} parent=1 // loop_pre_header
      _
    $region3: #{tpu_custom_call.1} parent=1 // loop_header
      %s12 = sphi 0, %s16
      %p13 = scmp.ge.s32.totalorder %s12, 4
      %s22 = sphi 0, %s24
      %s25 = sphi 0, %s22
      %s26 = sphi 0, %s25
      %s42 = sphi 0, %s26
      %s46 = sphi 0, %s46
      %s48 = sphi 0, %s46
      %s49 = sphi 0, %s48
      %s63 = sphi 0, %s49
      %s67 = sphi 0, %s67
      %s69 = sphi 0, %s67
      %s70 = sphi 0, %s69
      %s84 = sphi 0, %s70
      %s88 = sphi 0, %s88
      %s90 = sphi 0, %s88
      %s91 = sphi 0, %s90
      %s105 = sphi 0, %s91
      %s109 = sphi 0, %s109
      %s111 = sphi 0, %s109
      %s112 = sphi 0, %s111
      %s126 = sphi 0, %s112
      %s132 = sphi 0, %s134
      %s135 = sphi 0, %s132
      %s136 = sphi 0, %s135
      %s152 = sphi 0, %s136
    $region4: #{tpu_custom_call.1} parent=1 // loop_header_branch
      %15 = sbr.rel (%p13) target = $region8
    $region5: #{tpu_custom_call.1} parent=1 // loop_body
      %s17 = ssub.s32 %s12, 1
      %s18 = ssub.s32 %s12, 2
      %s19 = sadd.s32 %s12, 1
      %s20 = ssub.s32 %s12, %s19
      %p21 = scmp.eq.s32.totalorder %s20, 0
      %s23 = sadd.s32 %s22, 1
      %s24 = scalar_select %p21, %s22, %s23
      %p27 = pneg %p21
      %p28 = scmp.eq.s32.totalorder %s12, 1
      %p29 = por %p27, %p28
      %p30 = scmp.ne.s32.totalorder %s22, %s25
      %p31 = scmp.eq.s32.totalorder %s12, 0
      %p32 = por %p30, %p31
      %p33 = scmp.ne.s32.totalorder %s22, %s25
      %p34 = scmp.eq.s32.totalorder %s17, 1
      %p35 = por %p33, %p34
      %p36 = scmp.ne.s32.totalorder %s25, %s26
      %p37 = scmp.eq.s32.totalorder %s17, 0
      %p38 = por %p36, %p37
      %p39 = scmp.ne.s32.totalorder %s25, %s26
      %p40 = scmp.eq.s32.totalorder %s18, 1
      %p41 = por %p39, %p40
      %p43 = scmp.ne.s32.totalorder %s26, %s42
      %p44 = scmp.eq.s32.totalorder %s18, 0
      %p45 = por %p43, %p44
      %s47 = sadd.s32 %s46, 1
      %p50 = scmp.eq.s32.totalorder %s12, 1
      %p51 = scmp.ne.s32.totalorder %s46, %s48
      %p52 = scmp.eq.s32.totalorder %s12, 0
      %p53 = por %p51, %p52
      %p54 = scmp.ne.s32.totalorder %s46, %s48
      %p55 = scmp.eq.s32.totalorder %s17, 1
      %p56 = por %p54, %p55
      %p57 = scmp.ne.s32.totalorder %s48, %s49
      %p58 = scmp.eq.s32.totalorder %s17, 0
      %p59 = por %p57, %p58
      %p60 = scmp.ne.s32.totalorder %s48, %s49
      %p61 = scmp.eq.s32.totalorder %s18, 1
      %p62 = por %p60, %p61
      %p64 = scmp.ne.s32.totalorder %s49, %s63
      %p65 = scmp.eq.s32.totalorder %s18, 0
      %p66 = por %p64, %p65
      %s68 = sadd.s32 %s67, 1
      %p71 = scmp.eq.s32.totalorder %s12, 1
      %p72 = scmp.ne.s32.totalorder %s67, %s69
      %p73 = scmp.eq.s32.totalorder %s12, 0
      %p74 = por %p72, %p73
      %p75 = scmp.ne.s32.totalorder %s67, %s69
      %p76 = scmp.eq.s32.totalorder %s17, 1
      %p77 = por %p75, %p76
      %p78 = scmp.ne.s32.totalorder %s69, %s70
      %p79 = scmp.eq.s32.totalorder %s17, 0
      %p80 = por %p78, %p79
      %p81 = scmp.ne.s32.totalorder %s69, %s70
      %p82 = scmp.eq.s32.totalorder %s18, 1
      %p83 = por %p81, %p82
      %p85 = scmp.ne.s32.totalorder %s70, %s84
      %p86 = scmp.eq.s32.totalorder %s18, 0
      %p87 = por %p85, %p86
      %s89 = sadd.s32 %s88, 1
      %p92 = scmp.eq.s32.totalorder %s12, 1
      %p93 = scmp.ne.s32.totalorder %s88, %s90
      %p94 = scmp.eq.s32.totalorder %s12, 0
      %p95 = por %p93, %p94
      %p96 = scmp.ne.s32.totalorder %s88, %s90
      %p97 = scmp.eq.s32.totalorder %s17, 1
      %p98 = por %p96, %p97
      %p99 = scmp.ne.s32.totalorder %s90, %s91
      %p100 = scmp.eq.s32.totalorder %s17, 0
      %p101 = por %p99, %p100
      %p102 = scmp.ne.s32.totalorder %s90, %s91
      %p103 = scmp.eq.s32.totalorder %s18, 1
      %p104 = por %p102, %p103
      %p106 = scmp.ne.s32.totalorder %s91, %s105
      %p107 = scmp.eq.s32.totalorder %s18, 0
      %p108 = por %p106, %p107
      %s110 = sadd.s32 %s109, 1
      %p113 = scmp.eq.s32.totalorder %s12, 1
      %p114 = scmp.ne.s32.totalorder %s109, %s111
      %p115 = scmp.eq.s32.totalorder %s12, 0
      %p116 = por %p114, %p115
      %p117 = scmp.ne.s32.totalorder %s109, %s111
      %p118 = scmp.eq.s32.totalorder %s17, 1
      %p119 = por %p117, %p118
      %p120 = scmp.ne.s32.totalorder %s111, %s112
      %p121 = scmp.eq.s32.totalorder %s17, 0
      %p122 = por %p120, %p121
      %p123 = scmp.ne.s32.totalorder %s111, %s112
      %p124 = scmp.eq.s32.totalorder %s18, 1
      %p125 = por %p123, %p124
      %p127 = scmp.ne.s32.totalorder %s112, %s126
      %p128 = scmp.eq.s32.totalorder %s18, 0
      %p129 = por %p127, %p128
      %s130 = ssub.s32 %s12, %s19
      %p131 = scmp.eq.s32.totalorder %s130, 0
      %s133 = sadd.s32 %s132, 1
      %s134 = scalar_select %p131, %s132, %s133
      %p137 = pneg %p131
      %p138 = scmp.eq.s32.totalorder %s12, 1
      %p139 = por %p137, %p138
      %p140 = scmp.ne.s32.totalorder %s132, %s135
      %p141 = scmp.eq.s32.totalorder %s12, 0
      %p142 = por %p140, %p141
      %p143 = scmp.ne.s32.totalorder %s132, %s135
      %p144 = scmp.eq.s32.totalorder %s17, 1
      %p145 = por %p143, %p144
      %p146 = scmp.ne.s32.totalorder %s135, %s136
      %p147 = scmp.eq.s32.totalorder %s17, 0
      %p148 = por %p146, %p147
      %p149 = scmp.ne.s32.totalorder %s135, %s136
      %p150 = scmp.eq.s32.totalorder %s18, 1
      %p151 = por %p149, %p150
      %p153 = scmp.ne.s32.totalorder %s136, %s152
      %p154 = scmp.eq.s32.totalorder %s18, 0
      %p155 = por %p153, %p154
      %p156 = scmp.le.s32.totalorder 1, %s12
      %p157 = scmp.lt.s32.totalorder %s12, 3
      %p158 = pnand %p156, %p157
      %p159 = pneg %p158
      // Predicated region
      $region9: #{tpu_custom_call.1} parent=5 // pred_check
        _
      $region10: #{tpu_custom_call.1} parent=5 // pred_check_branch
        %161 = sbr.rel (%p158) target = $region12
      $region11: #{tpu_custom_call.1} parent=5 // pred_region
        %s162 = ssub.s32 %s12, 1
        // Predicated region
        $region13: #{tpu_custom_call.1} parent=11 // pred_check
          %p163 = pneg %p59
        $region14: #{tpu_custom_call.1} parent=11 // pred_check_branch
          %165 = sbr.rel (%p163) target = $region16
        $region15: #{tpu_custom_call.1} parent=11 // pred_region
          _
        $region16: #{tpu_custom_call.1} parent=11 // pred_fallthru
          _
        // Predicated region
        $region17: #{tpu_custom_call.1} parent=11 // pred_check
          %p166 = pneg %p80
        $region18: #{tpu_custom_call.1} parent=11 // pred_check_branch
          %168 = sbr.rel (%p166) target = $region20
        $region19: #{tpu_custom_call.1} parent=11 // pred_region
          _
        $region20: #{tpu_custom_call.1} parent=11 // pred_fallthru
          _
        // Predicated region
        $region21: #{tpu_custom_call.1} parent=11 // pred_check
          %p169 = pneg %p101
        $region22: #{tpu_custom_call.1} parent=11 // pred_check_branch
          %171 = sbr.rel (%p169) target = $region24
        $region23: #{tpu_custom_call.1} parent=11 // pred_region
          %s173 = ssub.s32 3072, 3072
          %174 = vsyncadd [#allocation5], %s173
          %s175 = sshll.u32 [#allocation4], 4
          %s176 = int_to_ptr.vmem [resolvable:$true] %s175
          %181 = dma.hbm_to_vmem [thread:$0]  %s3, 3072, %s176, [#allocation5], 64, 64, 4
        $region24: #{tpu_custom_call.1} parent=11 // pred_fallthru
          _
        // Predicated region
        $region25: #{tpu_custom_call.1} parent=11 // pred_check
          %p182 = pneg %p122
        $region26: #{tpu_custom_call.1} parent=11 // pred_check_branch
          %184 = sbr.rel (%p182) target = $region28
        $region27: #{tpu_custom_call.1} parent=11 // pred_region
          _
        $region28: #{tpu_custom_call.1} parent=11 // pred_fallthru
          _
      $region12: #{tpu_custom_call.1} parent=5 // pred_fallthru
        _
      %p185 = scmp.lt.s32.totalorder %s12, 2
      // Predicated region
      $region29: #{tpu_custom_call.1} parent=5 // pred_check
        %p186 = pneg %p185
      $region30: #{tpu_custom_call.1} parent=5 // pred_check_branch
        %188 = sbr.rel (%p186) target = $region32
      $region31: #{tpu_custom_call.1} parent=5 // pred_region
        // Predicated region
        $region33: #{tpu_custom_call.1} parent=31 // pred_check
          %p189 = pneg %p32
        $region34: #{tpu_custom_call.1} parent=31 // pred_check_branch
          %191 = sbr.rel (%p189) target = $region36
        $region35: #{tpu_custom_call.1} parent=31 // pred_region
          %s192 = smul.u32 4, %s12
          %p193 = scmp.lt.s32.totalorder %s192, 7
          %s194 = scalar_select %p193, %s192, 7
          %s195 = smul.addr %s194, 8
          %s196 = scalar_lea.vmem %s0, %s195
          %s197 = smul.u32 4, %s12
        $region36: #{tpu_custom_call.1} parent=31 // pred_fallthru
          _
      $region32: #{tpu_custom_call.1} parent=5 // pred_fallthru
        _
      %p198 = scmp.le.s32.totalorder 1, %s12
      %p199 = scmp.lt.s32.totalorder %s12, 3
      %p200 = pnand %p198, %p199
      %p201 = pneg %p200
      // Predicated region
      $region37: #{tpu_custom_call.1} parent=5 // pred_check
        _
      $region38: #{tpu_custom_call.1} parent=5 // pred_check_branch
        %203 = sbr.rel (%p200) target = $region40
      $region39: #{tpu_custom_call.1} parent=5 // pred_region
        %s204 = ssub.s32 %s12, 1
        // Predicated region
        $region41: #{tpu_custom_call.1} parent=39 // pred_check
          %p205 = pneg %p101
        $region42: #{tpu_custom_call.1} parent=39 // pred_check_branch
          %207 = sbr.rel (%p205) target = $region44
        $region43: #{tpu_custom_call.1} parent=39 // pred_region
          %208 = dma.done [#allocation5], 3072
        $region44: #{tpu_custom_call.1} parent=39 // pred_fallthru
          _
        %s209 = smul.u32 4, %s17
        %p210 = scmp.lt.s32.totalorder %s209, 7
        %s211 = scalar_select %p210, %s209, 7
        %s212 = smul.addr %s211, 8
        %s213 = scalar_lea.vmem %s0, %s212
        %p214 = pneg %p38
        %p215 = pneg %p35
        %p216 = pneg %p59
        %p217 = pneg %p56
        %p218 = pneg %p80
        %p219 = pneg %p77
        %p220 = pneg %p101
        %p221 = pneg %p98
        %p222 = pneg %p122
        %p223 = pneg %p119
        %p224 = pneg %p148
        %p225 = pneg %p145
        %s226 = smul.u32 4, %s17
        %p227 = scmp.lt.s32.totalorder %s226, 7
        %s228 = scalar_select %p227, %s226, 7
        %s229 = smul.addr %s228, 4
        %s230 = smul.addr %s229, 8
        %s231 = scalar_lea.vmem %s5, %s230
        %s232 = smul.u32 4, %s17
        %p233 = scmp.lt.s32.totalorder %s232, 7
        %s234 = scalar_select %p233, %s232, 7
        %s235 = smul.addr %s234, 8
        %s236 = scalar_lea.vmem %s0, %s235
        %s237 = smul.u32 4, %s17
        %s238 = smul.u32 4, %s17
        %p239 = scmp.lt.s32.totalorder %s238, 7
        %s240 = scalar_select %p239, %s238, 7
        %s241 = smul.addr %s240, 4
        %s242 = smul.addr %s241, 8
        %s243 = scalar_lea.vmem %s5, %s242
        %s244 = smul.u32 4, %s17
        %v246 = vld [vmem:[%s236] sm:$0x3f]
        %v247 = vld [vmem:[%s236 + $0x8] sm:$0x3f]
        %v248 = vld [vmem:[%s236 + $0x10] sm:$0x3f]
        %v249 = vld [vmem:[%s236 + $0x18] sm:$0x3f]
        %250 = vxpose.xlu0.b32.start [1/16] %v246, 128
        %251 = vxpose.xlu0.b32.cont [2/16] 0.0, 128
        %252 = vxpose.xlu0.b32.cont [3/16] 0.0, 128
        %253 = vxpose.xlu0.b32.cont [4/16] 0.0, 128
        %254 = vxpose.xlu0.b32.cont [5/16] 0.0, 128
        %255 = vxpose.xlu0.b32.cont [6/16] 0.0, 128
        %256 = vxpose.xlu0.b32.cont [7/16] 0.0, 128
        %257 = vxpose.xlu0.b32.cont [8/16] 0.0, 128
        %258 = vxpose.xlu0.b32.cont [9/16] 0.0, 128
        %259 = vxpose.xlu0.b32.cont [10/16] 0.0, 128
        %260 = vxpose.xlu0.b32.cont [11/16] 0.0, 128
        %261 = vxpose.xlu0.b32.cont [12/16] 0.0, 128
        %262 = vxpose.xlu0.b32.cont [13/16] 0.0, 128
        %263 = vxpose.xlu0.b32.cont [14/16] 0.0, 128
        %264 = vxpose.xlu0.b32.cont [15/16] 0.0, 128
        %265 = vxpose.xlu0.b32.end [16/16] 0.0, 128
        %v266 = vpop.trf.xlu0
        %v267 = vpop.trf.xlu0
        %v268 = vpop.trf.xlu0
        %v269 = vpop.trf.xlu0
        %v270 = vpop.trf.xlu0
        %v271 = vpop.trf.xlu0
        %v272 = vpop.trf.xlu0
        %v273 = vpop.trf.xlu0
        %v274 = vpop.trf.xlu0
        %v275 = vpop.trf.xlu0
        %v276 = vpop.trf.xlu0
        %v277 = vpop.trf.xlu0
        %v278 = vpop.trf.xlu0
        %v279 = vpop.trf.xlu0
        %v280 = vpop.trf.xlu0
        %v281 = vpop.trf.xlu0
        %282 = vxpose.xlu0.b32.start [1/16] %v247, 128
        %283 = vxpose.xlu0.b32.cont [2/16] 0.0, 128
        %284 = vxpose.xlu0.b32.cont [3/16] 0.0, 128
        %285 = vxpose.xlu0.b32.cont [4/16] 0.0, 128
        %286 = vxpose.xlu0.b32.cont [5/16] 0.0, 128
        %287 = vxpose.xlu0.b32.cont [6/16] 0.0, 128
        %288 = vxpose.xlu0.b32.cont [7/16] 0.0, 128
        %289 = vxpose.xlu0.b32.cont [8/16] 0.0, 128
        %290 = vxpose.xlu0.b32.cont [9/16] 0.0, 128
        %291 = vxpose.xlu0.b32.cont [10/16] 0.0, 128
        %292 = vxpose.xlu0.b32.cont [11/16] 0.0, 128
        %293 = vxpose.xlu0.b32.cont [12/16] 0.0, 128
        %294 = vxpose.xlu0.b32.cont [13/16] 0.0, 128
        %295 = vxpose.xlu0.b32.cont [14/16] 0.0, 128
        %296 = vxpose.xlu0.b32.cont [15/16] 0.0, 128
        %297 = vxpose.xlu0.b32.end [16/16] 0.0, 128
        %v298 = vpop.trf.xlu0
        %v299 = vpop.trf.xlu0
        %v300 = vpop.trf.xlu0
        %v301 = vpop.trf.xlu0
        %v302 = vpop.trf.xlu0
        %v303 = vpop.trf.xlu0
        %v304 = vpop.trf.xlu0
        %v305 = vpop.trf.xlu0
        %v306 = vpop.trf.xlu0
        %v307 = vpop.trf.xlu0
        %v308 = vpop.trf.xlu0
        %v309 = vpop.trf.xlu0
        %v310 = vpop.trf.xlu0
        %v311 = vpop.trf.xlu0
        %v312 = vpop.trf.xlu0
        %v313 = vpop.trf.xlu0
        %314 = vxpose.xlu0.b32.start [1/16] %v248, 128
        %315 = vxpose.xlu0.b32.cont [2/16] 0.0, 128
        %316 = vxpose.xlu0.b32.cont [3/16] 0.0, 128
        %317 = vxpose.xlu0.b32.cont [4/16] 0.0, 128
        %318 = vxpose.xlu0.b32.cont [5/16] 0.0, 128
        %319 = vxpose.xlu0.b32.cont [6/16] 0.0, 128
        %320 = vxpose.xlu0.b32.cont [7/16] 0.0, 128
        %321 = vxpose.xlu0.b32.cont [8/16] 0.0, 128
        %322 = vxpose.xlu0.b32.cont [9/16] 0.0, 128
        %323 = vxpose.xlu0.b32.cont [10/16] 0.0, 128
        %324 = vxpose.xlu0.b32.cont [11/16] 0.0, 128
        %325 = vxpose.xlu0.b32.cont [12/16] 0.0, 128
        %326 = vxpose.xlu0.b32.cont [13/16] 0.0, 128
        %327 = vxpose.xlu0.b32.cont [14/16] 0.0, 128
        %328 = vxpose.xlu0.b32.cont [15/16] 0.0, 128
        %329 = vxpose.xlu0.b32.end [16/16] 0.0, 128
        %v330 = vpop.trf.xlu0
        %v331 = vpop.trf.xlu0
        %v332 = vpop.trf.xlu0
        %v333 = vpop.trf.xlu0
        %v334 = vpop.trf.xlu0
        %v335 = vpop.trf.xlu0
        %v336 = vpop.trf.xlu0
        %v337 = vpop.trf.xlu0
        %v338 = vpop.trf.xlu0
        %v339 = vpop.trf.xlu0
        %v340 = vpop.trf.xlu0
        %v341 = vpop.trf.xlu0
        %v342 = vpop.trf.xlu0
        %v343 = vpop.trf.xlu0
        %v344 = vpop.trf.xlu0
        %v345 = vpop.trf.xlu0
        %346 = vxpose.xlu0.b32.start [1/16] %v249, 128
        %347 = vxpose.xlu0.b32.cont [2/16] 0.0, 128
        %348 = vxpose.xlu0.b32.cont [3/16] 0.0, 128
        %349 = vxpose.xlu0.b32.cont [4/16] 0.0, 128
        %350 = vxpose.xlu0.b32.cont [5/16] 0.0, 128
        %351 = vxpose.xlu0.b32.cont [6/16] 0.0, 128
        %352 = vxpose.xlu0.b32.cont [7/16] 0.0, 128
        %353 = vxpose.xlu0.b32.cont [8/16] 0.0, 128
        %354 = vxpose.xlu0.b32.cont [9/16] 0.0, 128
        %355 = vxpose.xlu0.b32.cont [10/16] 0.0, 128
        %356 = vxpose.xlu0.b32.cont [11/16] 0.0, 128
        %357 = vxpose.xlu0.b32.cont [12/16] 0.0, 128
        %358 = vxpose.xlu0.b32.cont [13/16] 0.0, 128
        %359 = vxpose.xlu0.b32.cont [14/16] 0.0, 128
        %360 = vxpose.xlu0.b32.cont [15/16] 0.0, 128
        %361 = vxpose.xlu0.b32.end [16/16] 0.0, 128
        %v362 = vpop.trf.xlu0
        %v363 = vpop.trf.xlu0
        %v364 = vpop.trf.xlu0
        %v365 = vpop.trf.xlu0
        %v366 = vpop.trf.xlu0
        %v367 = vpop.trf.xlu0
        %v368 = vpop.trf.xlu0
        %v369 = vpop.trf.xlu0
        %v370 = vpop.trf.xlu0
        %v371 = vpop.trf.xlu0
        %v372 = vpop.trf.xlu0
        %v373 = vpop.trf.xlu0
        %v374 = vpop.trf.xlu0
        %v375 = vpop.trf.xlu0
        %v376 = vpop.trf.xlu0
        %v377 = vpop.trf.xlu0
        %v378 = vpack.c.bf16 %v267, %v266
        %v379 = vpack.c.bf16 %v299, %v298
        %v380 = vpack.c.bf16 %v331, %v330
        %v381 = vpack.c.bf16 %v363, %v362
        %v382 = vld [vmem:[%s1] sm:$0x7]
        %v383 = vld [vmem:[%s2] sm:$0x1]
        %v385 = vlaneseq
        %v386 = vshrl.u32 %v385, 7
        %v387 = vsub.s32 0, %v386
        %v388 = vrot.slane %v383, %v387
        %vm390 = vcmask 48128
        %v392 = vsel %vm390, %v378, 0
        %v395 = vsel %vm390, %v379, 0
        %v398 = vsel %vm390, %v380, 0
        %v401 = vsel %vm390, %v381, 0
        %vm403 = vcmask 1042432
        %v405 = vsel %vm403, %v382, 0
        %407 = vmatprep.subr.bf16.mxu0 0
        %408 = vmatpush1.bf16.msra.mxu0 %v405
        %409 = vmatprep.subr.bf16.mxu0 0
        %410 = vmatpush1.bf16.msra.mxu0 0
        %411 = vmatprep.subr.bf16.mxu0 0
        %412 = vmatpush1.bf16.msra.mxu0 0
        %413 = vmatprep.subr.bf16.mxu0 0
        %414 = vmatpush1.bf16.msra.mxu0 0
        %415 = vmatprep.subr.bf16.mxu0 0
        %416 = vmatpush1.bf16.msra.mxu0 0
        %417 = vmatprep.subr.bf16.mxu0 0
        %418 = vmatpush1.bf16.msra.mxu0 0
        %419 = vmatprep.subr.bf16.mxu0 0
        %420 = vmatpush1.bf16.msra.mxu0 0
        %421 = vmatprep.subr.bf16.mxu0 0
        %422 = vmatpush1.bf16.msra.mxu0 0
        %423 = vmatprep.subr.bf16.mxu0 0
        %424 = vmatpush1.bf16.msra.mxu0 0
        %425 = vmatprep.subr.bf16.mxu0 0
        %426 = vmatpush1.bf16.msra.mxu0 0
        %427 = vmatprep.subr.bf16.mxu0 0
        %428 = vmatpush1.bf16.msra.mxu0 0
        %429 = vmatprep.subr.bf16.mxu0 0
        %430 = vmatpush1.bf16.msra.mxu0 0
        %431 = vmatprep.subr.bf16.mxu0 0
        %432 = vmatpush1.bf16.msra.mxu0 0
        %433 = vmatprep.subr.bf16.mxu0 0
        %434 = vmatpush1.bf16.msra.mxu0 0
        %435 = vmatprep.subr.bf16.mxu0 0
        %436 = vmatpush1.bf16.msra.mxu0 0
        %437 = vmatprep.subr.bf16.mxu0 0
        %438 = vmatpush1.bf16.msra.mxu0 0
        %439 = vmatprep.mubr.bf16.mxu0 0
        %440 = vmatmul.mubr.bf16.gmra.mrb[0].mxu0 %v392
        %v441 = vpop.f32.mrb[0].mxu0
        %v442 = vadd.f32 %v388, %v441
        %v443 = vpop.f32.mrb[0].mxu0
        %v444 = vpop.f32.mrb[0].mxu0
        %v445 = vadd.f32 %v388, %v444
        %v446 = vpop.f32.mrb[0].mxu0
        %447 = vmatprep.mubr.bf16.mxu0 0
        %448 = vmatmul.mubr.bf16.gmra.mrb[0].mxu0 %v395
        %v449 = vpop.f32.mrb[0].mxu0
        %v450 = vadd.f32 %v388, %v449
        %v451 = vpop.f32.mrb[0].mxu0
        %v452 = vpop.f32.mrb[0].mxu0
        %v453 = vadd.f32 %v388, %v452
        %v454 = vpop.f32.mrb[0].mxu0
        %455 = vmatprep.mubr.bf16.mxu0 0
        %456 = vmatmul.mubr.bf16.gmra.mrb[0].mxu0 %v398
        %v457 = vpop.f32.mrb[0].mxu0
        %v458 = vadd.f32 %v388, %v457
        %v459 = vpop.f32.mrb[0].mxu0
        %v460 = vpop.f32.mrb[0].mxu0
        %v461 = vadd.f32 %v388, %v460
        %v462 = vpop.f32.mrb[0].mxu0
        %463 = vmatprep.mubr.bf16.mxu0 0
        %464 = vmatmul.mubr.bf16.gmra.mrb[0].mxu0 %v401
        %v465 = vpop.f32.mrb[0].mxu0
        %v466 = vadd.f32 %v388, %v465
        %v467 = vpop.f32.mrb[0].mxu0
        %v468 = vpop.f32.mrb[0].mxu0
        %v469 = vadd.f32 %v388, %v468
        %v470 = vpop.f32.mrb[0].mxu0
        %471 = vdwg.mxu0
        %v472 = vxor.u32 %v442, 2147483648
        %v473 = vxor.u32 %v445, 2147483648
        %v474 = vxor.u32 %v450, 2147483648
        %v475 = vxor.u32 %v453, 2147483648
        %v476 = vxor.u32 %v458, 2147483648
        %v477 = vxor.u32 %v461, 2147483648
        %v478 = vxor.u32 %v466, 2147483648
        %v479 = vxor.u32 %v469, 2147483648
        %v480 = vmul.f32 %v472, 1.442695
        %v481 = vpow.pop %v480
        %v482 = vmul.f32 %v473, 1.442695
        %v483 = vpow.pop %v482
        %v484 = vmul.f32 %v474, 1.442695
        %v485 = vpow.pop %v484
        %v486 = vmul.f32 %v475, 1.442695
        %v487 = vpow.pop %v486
        %v488 = vmul.f32 %v476, 1.442695
        %v489 = vpow.pop %v488
        %v490 = vmul.f32 %v477, 1.442695
        %v491 = vpow.pop %v490
        %v492 = vmul.f32 %v478, 1.442695
        %v493 = vpow.pop %v492
        %v494 = vmul.f32 %v479, 1.442695
        %v495 = vpow.pop %v494
        %v496 = vadd.f32 %v481, 1.0
        %v497 = vadd.f32 %v483, 1.0
        %v498 = vadd.f32 %v485, 1.0
        %v499 = vadd.f32 %v487, 1.0
        %v500 = vadd.f32 %v489, 1.0
        %v501 = vadd.f32 %v491, 1.0
        %v502 = vadd.f32 %v493, 1.0
        %v503 = vadd.f32 %v495, 1.0
        %v504 = vrcp.pop %v496
        %v505 = vmul.f32 1.0, %v504
        %v506 = vrcp.pop %v497
        %v507 = vmul.f32 1.0, %v506
        %v508 = vrcp.pop %v498
        %v509 = vmul.f32 1.0, %v508
        %v510 = vrcp.pop %v499
        %v511 = vmul.f32 1.0, %v510
        %v512 = vrcp.pop %v500
        %v513 = vmul.f32 1.0, %v512
        %v514 = vrcp.pop %v501
        %v515 = vmul.f32 1.0, %v514
        %v516 = vrcp.pop %v502
        %v517 = vmul.f32 1.0, %v516
        %v518 = vrcp.pop %v503
        %v519 = vmul.f32 1.0, %v518
        %528 = vrot.lane.b32.xlu0 %v505, 96
        %v529 = vpop.permute.xlu0 %528
        %530 = vrot.lane.b32.xlu0 %v507, 96
        %v531 = vpop.permute.xlu0 %530
        %532 = vrot.lane.b32.xlu0 %v509, 96
        %v533 = vpop.permute.xlu0 %532
        %534 = vrot.lane.b32.xlu0 %v511, 96
        %v535 = vpop.permute.xlu0 %534
        %536 = vrot.lane.b32.xlu0 %v513, 96
        %v537 = vpop.permute.xlu0 %536
        %538 = vrot.lane.b32.xlu0 %v515, 96
        %v539 = vpop.permute.xlu0 %538
        %540 = vrot.lane.b32.xlu0 %v517, 96
        %v541 = vpop.permute.xlu0 %540
        %542 = vrot.lane.b32.xlu0 %v519, 96
        %v543 = vpop.permute.xlu0 %542
        %v552 = vmul.f32 %v442, %v529
        %v553 = vmul.f32 %v445, %v531
        %v554 = vmul.f32 %v450, %v533
        %v555 = vmul.f32 %v453, %v535
        %v556 = vmul.f32 %v458, %v537
        %v557 = vmul.f32 %v461, %v539
        %v558 = vmul.f32 %v466, %v541
        %v559 = vmul.f32 %v469, %v543
        %vm560 = vcmask 253952
        %561 = vst.msk [vmem:[#allocation3] sm:$0x1] %vm560, 0.0
        %562 = vst.msk [vmem:[#allocation3 + $0x10] sm:$0x1] %vm560, 0.0
        %563 = vst.msk [vmem:[#allocation3 + $0x20] sm:$0x1] %vm560, 0.0
        %564 = vst.msk [vmem:[#allocation3 + $0x30] sm:$0x1] %vm560, 0.0
        %v573 = vcombine.high %v552, %v552
        %v575 = vunpack.c.l.s4 1983009808
        %v576 = vunpack.c.0.s8 %v575
        %v577 = vlaneseq
        %v578 = vshrl.u32 %v577, 7
        %v579 = vsub.s32 %v576, %v578
        %v580 = vrot.slane %v552, %v579
        %v582 = vunpack.c.l.s4 1983009808
        %v583 = vunpack.c.0.s8 %v582
        %v584 = vlaneseq
        %v585 = vshrl.u32 %v584, 7
        %v586 = vsub.s32 %v583, %v585
        %v587 = vrot.slane %v573, %v586
        %v588 = vcombine.high %v580, %v580
        %v589 = vcombine.high %v587, %v587
        %v590 = vcombine.high %v553, %v553
        %v592 = vunpack.c.l.s4 1983009808
        %v593 = vunpack.c.0.s8 %v592
        %v594 = vlaneseq
        %v595 = vshrl.u32 %v594, 7
        %v596 = vsub.s32 %v593, %v595
        %v597 = vrot.slane %v553, %v596
        %v599 = vunpack.c.l.s4 1983009808
        %v600 = vunpack.c.0.s8 %v599
        %v601 = vlaneseq
        %v602 = vshrl.u32 %v601, 7
        %v603 = vsub.s32 %v600, %v602
        %v604 = vrot.slane %v590, %v603
        %v605 = vcombine.high %v597, %v597
        %v606 = vcombine.high %v604, %v604
        %v607 = vcombine.high %v554, %v554
        %v609 = vunpack.c.l.s4 1983009808
        %v610 = vunpack.c.0.s8 %v609
        %v611 = vlaneseq
        %v612 = vshrl.u32 %v611, 7
        %v613 = vsub.s32 %v610, %v612
        %v614 = vrot.slane %v554, %v613
        %v616 = vunpack.c.l.s4 1983009808
        %v617 = vunpack.c.0.s8 %v616
        %v618 = vlaneseq
        %v619 = vshrl.u32 %v618, 7
        %v620 = vsub.s32 %v617, %v619
        %v621 = vrot.slane %v607, %v620
        %v622 = vcombine.high %v614, %v614
        %v623 = vcombine.high %v621, %v621
        %v624 = vcombine.high %v555, %v555
        %v626 = vunpack.c.l.s4 1983009808
        %v627 = vunpack.c.0.s8 %v626
        %v628 = vlaneseq
        %v629 = vshrl.u32 %v628, 7
        %v630 = vsub.s32 %v627, %v629
        %v631 = vrot.slane %v555, %v630
        %v633 = vunpack.c.l.s4 1983009808
        %v634 = vunpack.c.0.s8 %v633
        %v635 = vlaneseq
        %v636 = vshrl.u32 %v635, 7
        %v637 = vsub.s32 %v634, %v636
        %v638 = vrot.slane %v624, %v637
        %v639 = vcombine.high %v631, %v631
        %v640 = vcombine.high %v638, %v638
        %v641 = vcombine.high %v556, %v556
        %v643 = vunpack.c.l.s4 1983009808
        %v644 = vunpack.c.0.s8 %v643
        %v645 = vlaneseq
        %v646 = vshrl.u32 %v645, 7
        %v647 = vsub.s32 %v644, %v646
        %v648 = vrot.slane %v556, %v647
        %v650 = vunpack.c.l.s4 1983009808
        %v651 = vunpack.c.0.s8 %v650
        %v652 = vlaneseq
        %v653 = vshrl.u32 %v652, 7
        %v654 = vsub.s32 %v651, %v653
        %v655 = vrot.slane %v641, %v654
        %v656 = vcombine.high %v648, %v648
        %v657 = vcombine.high %v655, %v655
        %v658 = vcombine.high %v557, %v557
        %v660 = vunpack.c.l.s4 1983009808
        %v661 = vunpack.c.0.s8 %v660
        %v662 = vlaneseq
        %v663 = vshrl.u32 %v662, 7
        %v664 = vsub.s32 %v661, %v663
        %v665 = vrot.slane %v557, %v664
        %v667 = vunpack.c.l.s4 1983009808
        %v668 = vunpack.c.0.s8 %v667
        %v669 = vlaneseq
        %v670 = vshrl.u32 %v669, 7
        %v671 = vsub.s32 %v668, %v670
        %v672 = vrot.slane %v658, %v671
        %v673 = vcombine.high %v665, %v665
        %v674 = vcombine.high %v672, %v672
        %v675 = vcombine.high %v558, %v558
        %v677 = vunpack.c.l.s4 1983009808
        %v678 = vunpack.c.0.s8 %v677
        %v679 = vlaneseq
        %v680 = vshrl.u32 %v679, 7
        %v681 = vsub.s32 %v678, %v680
        %v682 = vrot.slane %v558, %v681
        %v684 = vunpack.c.l.s4 1983009808
        %v685 = vunpack.c.0.s8 %v684
        %v686 = vlaneseq
        %v687 = vshrl.u32 %v686, 7
        %v688 = vsub.s32 %v685, %v687
        %v689 = vrot.slane %v675, %v688
        %v690 = vcombine.high %v682, %v682
        %v691 = vcombine.high %v689, %v689
        %v692 = vcombine.high %v559, %v559
        %v694 = vunpack.c.l.s4 1983009808
        %v695 = vunpack.c.0.s8 %v694
        %v696 = vlaneseq
        %v697 = vshrl.u32 %v696, 7
        %v698 = vsub.s32 %v695, %v697
        %v699 = vrot.slane %v559, %v698
        %v701 = vunpack.c.l.s4 1983009808
        %v702 = vunpack.c.0.s8 %v701
        %v703 = vlaneseq
        %v704 = vshrl.u32 %v703, 7
        %v705 = vsub.s32 %v702, %v704
        %v706 = vrot.slane %v692, %v705
        %v707 = vcombine.high %v699, %v699
        %v708 = vcombine.high %v706, %v706
        %v709 = vlaneseq
        %v710 = vshrl.u32 %v709, 7
        %v711 = vsub.s32 0, %v710
        %v712 = vrot.slane %v580, %v711
        %v713 = vlaneseq
        %v714 = vshrl.u32 %v713, 7
        %v715 = vsub.s32 0, %v714
        %v716 = vrot.slane %v588, %v715
        %v717 = vlaneseq
        %v718 = vshrl.u32 %v717, 7
        %v719 = vsub.s32 0, %v718
        %v720 = vrot.slane %v587, %v719
        %v721 = vlaneseq
        %v722 = vshrl.u32 %v721, 7
        %v723 = vsub.s32 0, %v722
        %v724 = vrot.slane %v589, %v723
        %v725 = vlaneseq
        %v726 = vshrl.u32 %v725, 7
        %v727 = vsub.s32 0, %v726
        %v728 = vrot.slane %v597, %v727
        %v729 = vlaneseq
        %v730 = vshrl.u32 %v729, 7
        %v731 = vsub.s32 0, %v730
        %v732 = vrot.slane %v605, %v731
        %v733 = vlaneseq
        %v734 = vshrl.u32 %v733, 7
        %v735 = vsub.s32 0, %v734
        %v736 = vrot.slane %v604, %v735
        %v737 = vlaneseq
        %v738 = vshrl.u32 %v737, 7
        %v739 = vsub.s32 0, %v738
        %v740 = vrot.slane %v606, %v739
        %v741 = vlaneseq
        %v742 = vshrl.u32 %v741, 7
        %v743 = vsub.s32 0, %v742
        %v744 = vrot.slane %v614, %v743
        %v745 = vlaneseq
        %v746 = vshrl.u32 %v745, 7
        %v747 = vsub.s32 0, %v746
        %v748 = vrot.slane %v622, %v747
        %v749 = vlaneseq
        %v750 = vshrl.u32 %v749, 7
        %v751 = vsub.s32 0, %v750
        %v752 = vrot.slane %v621, %v751
        %v753 = vlaneseq
        %v754 = vshrl.u32 %v753, 7
        %v755 = vsub.s32 0, %v754
        %v756 = vrot.slane %v623, %v755
        %v757 = vlaneseq
        %v758 = vshrl.u32 %v757, 7
        %v759 = vsub.s32 0, %v758
        %v760 = vrot.slane %v631, %v759
        %v761 = vlaneseq
        %v762 = vshrl.u32 %v761, 7
        %v763 = vsub.s32 0, %v762
        %v764 = vrot.slane %v639, %v763
        %v765 = vlaneseq
        %v766 = vshrl.u32 %v765, 7
        %v767 = vsub.s32 0, %v766
        %v768 = vrot.slane %v638, %v767
        %v769 = vlaneseq
        %v770 = vshrl.u32 %v769, 7
        %v771 = vsub.s32 0, %v770
        %v772 = vrot.slane %v640, %v771
        %v773 = vlaneseq
        %v774 = vshrl.u32 %v773, 7
        %v775 = vsub.s32 0, %v774
        %v776 = vrot.slane %v648, %v775
        %v777 = vlaneseq
        %v778 = vshrl.u32 %v777, 7
        %v779 = vsub.s32 0, %v778
        %v780 = vrot.slane %v656, %v779
        %v781 = vlaneseq
        %v782 = vshrl.u32 %v781, 7
        %v783 = vsub.s32 0, %v782
        %v784 = vrot.slane %v655, %v783
        %v785 = vlaneseq
        %v786 = vshrl.u32 %v785, 7
        %v787 = vsub.s32 0, %v786
        %v788 = vrot.slane %v657, %v787
        %v789 = vlaneseq
        %v790 = vshrl.u32 %v789, 7
        %v791 = vsub.s32 0, %v790
        %v792 = vrot.slane %v665, %v791
        %v793 = vlaneseq
        %v794 = vshrl.u32 %v793, 7
        %v795 = vsub.s32 0, %v794
        %v796 = vrot.slane %v673, %v795
        %v797 = vlaneseq
        %v798 = vshrl.u32 %v797, 7
        %v799 = vsub.s32 0, %v798
        %v800 = vrot.slane %v672, %v799
        %v801 = vlaneseq
        %v802 = vshrl.u32 %v801, 7
        %v803 = vsub.s32 0, %v802
        %v804 = vrot.slane %v674, %v803
        %v805 = vlaneseq
        %v806 = vshrl.u32 %v805, 7
        %v807 = vsub.s32 0, %v806
        %v808 = vrot.slane %v682, %v807
        %v809 = vlaneseq
        %v810 = vshrl.u32 %v809, 7
        %v811 = vsub.s32 0, %v810
        %v812 = vrot.slane %v690, %v811
        %v813 = vlaneseq
        %v814 = vshrl.u32 %v813, 7
        %v815 = vsub.s32 0, %v814
        %v816 = vrot.slane %v689, %v815
        %v817 = vlaneseq
        %v818 = vshrl.u32 %v817, 7
        %v819 = vsub.s32 0, %v818
        %v820 = vrot.slane %v691, %v819
        %v821 = vlaneseq
        %v822 = vshrl.u32 %v821, 7
        %v823 = vsub.s32 0, %v822
        %v824 = vrot.slane %v699, %v823
        %v825 = vlaneseq
        %v826 = vshrl.u32 %v825, 7
        %v827 = vsub.s32 0, %v826
        %v828 = vrot.slane %v707, %v827
        %v829 = vlaneseq
        %v830 = vshrl.u32 %v829, 7
        %v831 = vsub.s32 0, %v830
        %v832 = vrot.slane %v706, %v831
        %v833 = vlaneseq
        %v834 = vshrl.u32 %v833, 7
        %v835 = vsub.s32 0, %v834
        %v836 = vrot.slane %v708, %v835
        %vm837 = vcmask 1041409
        %v838 = vsel %vm837, %v716, %v712
        %vm839 = vcmask 1042434
        %v840 = vsel %vm839, %v720, %v838
        %vm841 = vcmask 1043459
        %v842 = vsel %vm841, %v724, %v840
        %vm843 = vcmask 1044484
        %v844 = vsel %vm843, %v728, %v842
        %vm845 = vcmask 1045509
        %v846 = vsel %vm845, %v732, %v844
        %vm847 = vcmask 1046534
        %v848 = vsel %vm847, %v736, %v846
        %vm849 = vcmask 1047559
        %v850 = vsel %vm849, %v740, %v848
        %v851 = vsel %vm837, %v748, %v744
        %v852 = vsel %vm839, %v752, %v851
        %v853 = vsel %vm841, %v756, %v852
        %v854 = vsel %vm843, %v760, %v853
        %v855 = vsel %vm845, %v764, %v854
        %v856 = vsel %vm847, %v768, %v855
        %v857 = vsel %vm849, %v772, %v856
        %v858 = vsel %vm837, %v780, %v776
        %v859 = vsel %vm839, %v784, %v858
        %v860 = vsel %vm841, %v788, %v859
        %v861 = vsel %vm843, %v792, %v860
        %v862 = vsel %vm845, %v796, %v861
        %v863 = vsel %vm847, %v800, %v862
        %v864 = vsel %vm849, %v804, %v863
        %v865 = vsel %vm837, %v812, %v808
        %v866 = vsel %vm839, %v816, %v865
        %v867 = vsel %vm841, %v820, %v866
        %v868 = vsel %vm843, %v824, %v867
        %v869 = vsel %vm845, %v828, %v868
        %v870 = vsel %vm847, %v832, %v869
        %v871 = vsel %vm849, %v836, %v870
        %vm876 = vcmask 261120
        %877 = vst.msk [vmem:[#allocation2] sm:$0xff] %vm876, %v850
        %878 = vst.msk [vmem:[#allocation2 + $0x10] sm:$0xff] %vm876, %v857
        %879 = vst.msk [vmem:[#allocation2 + $0x20] sm:$0xff] %vm876, %v864
        %880 = vst.msk [vmem:[#allocation2 + $0x30] sm:$0xff] %vm876, %v871
        %881 = vst.msk [vmem:[#allocation2 + $0x8] sm:$0x1] %vm560, 0.0
        %882 = vst.msk [vmem:[#allocation2 + $0x18] sm:$0x1] %vm560, 0.0
        %883 = vst.msk [vmem:[#allocation2 + $0x28] sm:$0x1] %vm560, 0.0
        %884 = vst.msk [vmem:[#allocation2 + $0x38] sm:$0x1] %vm560, 0.0
        %v885 = vlaneseq
        %v886 = vshrl.u32 %v885, 7
        %v887 = vsub.s32 1, %v886
        %v888 = vrot.slane %v580, %v887
        %v889 = vlaneseq
        %v890 = vshrl.u32 %v889, 7
        %v891 = vsub.s32 1, %v890
        %v892 = vrot.slane %v588, %v891
        %v893 = vlaneseq
        %v894 = vshrl.u32 %v893, 7
        %v895 = vsub.s32 1, %v894
        %v896 = vrot.slane %v587, %v895
        %v897 = vlaneseq
        %v898 = vshrl.u32 %v897, 7
        %v899 = vsub.s32 1, %v898
        %v900 = vrot.slane %v589, %v899
        %v901 = vlaneseq
        %v902 = vshrl.u32 %v901, 7
        %v903 = vsub.s32 1, %v902
        %v904 = vrot.slane %v597, %v903
        %v905 = vlaneseq
        %v906 = vshrl.u32 %v905, 7
        %v907 = vsub.s32 1, %v906
        %v908 = vrot.slane %v605, %v907
        %v909 = vlaneseq
        %v910 = vshrl.u32 %v909, 7
        %v911 = vsub.s32 1, %v910
        %v912 = vrot.slane %v604, %v911
        %v913 = vlaneseq
        %v914 = vshrl.u32 %v913, 7
        %v915 = vsub.s32 1, %v914
        %v916 = vrot.slane %v606, %v915
        %v917 = vlaneseq
        %v918 = vshrl.u32 %v917, 7
        %v919 = vsub.s32 1, %v918
        %v920 = vrot.slane %v614, %v919
        %v921 = vlaneseq
        %v922 = vshrl.u32 %v921, 7
        %v923 = vsub.s32 1, %v922
        %v924 = vrot.slane %v622, %v923
        %v925 = vlaneseq
        %v926 = vshrl.u32 %v925, 7
        %v927 = vsub.s32 1, %v926
        %v928 = vrot.slane %v621, %v927
        %v929 = vlaneseq
        %v930 = vshrl.u32 %v929, 7
        %v931 = vsub.s32 1, %v930
        %v932 = vrot.slane %v623, %v931
        %v933 = vlaneseq
        %v934 = vshrl.u32 %v933, 7
        %v935 = vsub.s32 1, %v934
        %v936 = vrot.slane %v631, %v935
        %v937 = vlaneseq
        %v938 = vshrl.u32 %v937, 7
        %v939 = vsub.s32 1, %v938
        %v940 = vrot.slane %v639, %v939
        %v941 = vlaneseq
        %v942 = vshrl.u32 %v941, 7
        %v943 = vsub.s32 1, %v942
        %v944 = vrot.slane %v638, %v943
        %v945 = vlaneseq
        %v946 = vshrl.u32 %v945, 7
        %v947 = vsub.s32 1, %v946
        %v948 = vrot.slane %v640, %v947
        %v949 = vlaneseq
        %v950 = vshrl.u32 %v949, 7
        %v951 = vsub.s32 1, %v950
        %v952 = vrot.slane %v648, %v951
        %v953 = vlaneseq
        %v954 = vshrl.u32 %v953, 7
        %v955 = vsub.s32 1, %v954
        %v956 = vrot.slane %v656, %v955
        %v957 = vlaneseq
        %v958 = vshrl.u32 %v957, 7
        %v959 = vsub.s32 1, %v958
        %v960 = vrot.slane %v655, %v959
        %v961 = vlaneseq
        %v962 = vshrl.u32 %v961, 7
        %v963 = vsub.s32 1, %v962
        %v964 = vrot.slane %v657, %v963
        %v965 = vlaneseq
        %v966 = vshrl.u32 %v965, 7
        %v967 = vsub.s32 1, %v966
        %v968 = vrot.slane %v665, %v967
        %v969 = vlaneseq
        %v970 = vshrl.u32 %v969, 7
        %v971 = vsub.s32 1, %v970
        %v972 = vrot.slane %v673, %v971
        %v973 = vlaneseq
        %v974 = vshrl.u32 %v973, 7
        %v975 = vsub.s32 1, %v974
        %v976 = vrot.slane %v672, %v975
        %v977 = vlaneseq
        %v978 = vshrl.u32 %v977, 7
        %v979 = vsub.s32 1, %v978
        %v980 = vrot.slane %v674, %v979
        %v981 = vlaneseq
        %v982 = vshrl.u32 %v981, 7
        %v983 = vsub.s32 1, %v982
        %v984 = vrot.slane %v682, %v983
        %v985 = vlaneseq
        %v986 = vshrl.u32 %v985, 7
        %v987 = vsub.s32 1, %v986
        %v988 = vrot.slane %v690, %v987
        %v989 = vlaneseq
        %v990 = vshrl.u32 %v989, 7
        %v991 = vsub.s32 1, %v990
        %v992 = vrot.slane %v689, %v991
        %v993 = vlaneseq
        %v994 = vshrl.u32 %v993, 7
        %v995 = vsub.s32 1, %v994
        %v996 = vrot.slane %v691, %v995
        %v997 = vlaneseq
        %v998 = vshrl.u32 %v997, 7
        %v999 = vsub.s32 1, %v998
        %v1000 = vrot.slane %v699, %v999
        %v1001 = vlaneseq
        %v1002 = vshrl.u32 %v1001, 7
        %v1003 = vsub.s32 1, %v1002
        %v1004 = vrot.slane %v707, %v1003
        %v1005 = vlaneseq
        %v1006 = vshrl.u32 %v1005, 7
        %v1007 = vsub.s32 1, %v1006
        %v1008 = vrot.slane %v706, %v1007
        %v1009 = vlaneseq
        %v1010 = vshrl.u32 %v1009, 7
        %v1011 = vsub.s32 1, %v1010
        %v1012 = vrot.slane %v708, %v1011
        %v1013 = vsel %vm839, %v892, %v888
        %v1014 = vsel %vm841, %v896, %v1013
        %v1015 = vsel %vm843, %v900, %v1014
        %v1016 = vsel %vm845, %v904, %v1015
        %v1017 = vsel %vm847, %v908, %v1016
        %v1018 = vsel %vm849, %v912, %v1017
        %v1019 = vsel %vm839, %v924, %v920
        %v1020 = vsel %vm841, %v928, %v1019
        %v1021 = vsel %vm843, %v932, %v1020
        %v1022 = vsel %vm845, %v936, %v1021
        %v1023 = vsel %vm847, %v940, %v1022
        %v1024 = vsel %vm849, %v944, %v1023
        %v1025 = vsel %vm839, %v956, %v952
        %v1026 = vsel %vm841, %v960, %v1025
        %v1027 = vsel %vm843, %v964, %v1026
        %v1028 = vsel %vm845, %v968, %v1027
        %v1029 = vsel %vm847, %v972, %v1028
        %v1030 = vsel %vm849, %v976, %v1029
        %v1031 = vsel %vm839, %v988, %v984
        %v1032 = vsel %vm841, %v992, %v1031
        %v1033 = vsel %vm843, %v996, %v1032
        %v1034 = vsel %vm845, %v1000, %v1033
        %v1035 = vsel %vm847, %v1004, %v1034
        %v1036 = vsel %vm849, %v1008, %v1035
        %vm1045 = vcmask 261121
        %1046 = vst.msk [vmem:[#allocation3] sm:$0xfe] %vm1045, %v1018
        %1047 = vst.msk [vmem:[#allocation3 + $0x8] sm:$0x1] %vm560, %v916
        %1048 = vst.msk [vmem:[#allocation3 + $0x10] sm:$0xfe] %vm1045, %v1024
        %1049 = vst.msk [vmem:[#allocation3 + $0x18] sm:$0x1] %vm560, %v948
        %1050 = vst.msk [vmem:[#allocation3 + $0x20] sm:$0xfe] %vm1045, %v1030
        %1051 = vst.msk [vmem:[#allocation3 + $0x28] sm:$0x1] %vm560, %v980
        %1052 = vst.msk [vmem:[#allocation3 + $0x30] sm:$0xfe] %vm1045, %v1036
        %1053 = vst.msk [vmem:[#allocation3 + $0x38] sm:$0x1] %vm560, %v1012
        %v1054 = vld [vmem:[#allocation2] sm:$0xff]
        %v1055 = vld [vmem:[#allocation2 + $0x10] sm:$0xff]
        %v1056 = vld [vmem:[#allocation2 + $0x20] sm:$0xff]
        %v1057 = vld [vmem:[#allocation2 + $0x30] sm:$0xff]
        %v1058 = vld [vmem:[#allocation3 + $0x1] sm:$0xff]
        %v1059 = vld [vmem:[#allocation3 + $0x11] sm:$0xff]
        %v1060 = vld [vmem:[#allocation3 + $0x21] sm:$0xff]
        %v1061 = vld [vmem:[#allocation3 + $0x31] sm:$0xff]
        %v1062 = vld [vmem:[#allocation3] sm:$0xff]
        %v1063 = vld [vmem:[#allocation3 + $0x10] sm:$0xff]
        %v1064 = vld [vmem:[#allocation3 + $0x20] sm:$0xff]
        %v1065 = vld [vmem:[#allocation3 + $0x30] sm:$0xff]
        %v1066 = vpack.c.bf16 %v1063, %v1062
        %v1067 = vpack.c.bf16 %v1065, %v1064
        %v1068 = vld [vmem:[#allocation2 + $0x1] sm:$0xff]
        %v1069 = vld [vmem:[#allocation2 + $0x11] sm:$0xff]
        %v1070 = vld [vmem:[#allocation2 + $0x21] sm:$0xff]
        %v1071 = vld [vmem:[#allocation2 + $0x31] sm:$0xff]
        %v1072 = vpack.c.bf16 %v1069, %v1068
        %v1073 = vpack.c.bf16 %v1071, %v1070
        %v1074 = vld [vmem:[#allocation4] sm:$0xf]
        %v1075 = vld [vmem:[#allocation4 + $0x4] sm:$0xf]
        %v1076 = vld [vmem:[#allocation4 + $0x8] sm:$0xf]
        %v1077 = vld [vmem:[#allocation4 + $0xc] sm:$0xf]
        %v1078 = vpack.c.bf16 %v1055, %v1054
        %v1079 = vpack.c.bf16 %v1057, %v1056
        %s1080 = scalar_lea.vmem [#allocation4], 16
        %v1081 = vld [vmem:[%s1080] sm:$0xf]
        %v1082 = vld [vmem:[%s1080 + $0x4] sm:$0xf]
        %v1083 = vld [vmem:[%s1080 + $0x8] sm:$0xf]
        %v1084 = vld [vmem:[%s1080 + $0xc] sm:$0xf]
        %v1089 = vunpack.c.l.b16 %v1081
        %v1090 = vunpack.c.l.b16 %v1082
        %v1091 = vunpack.c.l.b16 %v1083
        %v1092 = vunpack.c.l.b16 %v1084
        %v1093 = vpack.c.b16 %v1090, %v1089
        %v1094 = vpack.c.b16 %v1092, %v1091
        %v1098 = vsel %vm876, %v1078, 0
        %v1101 = vsel %vm876, %v1079, 0
        %1103 = vmatprep.subr.bf16.mxu0 0
        %1104 = vmatpush1.bf16.msra.mxu0 %v1093
        %1105 = vmatprep.subr.bf16.mxu0 0
        %1106 = vmatpush1.bf16.msra.mxu0 %v1094
        %1107 = vmatprep.subr.bf16.mxu0 0
        %1108 = vmatpush1.bf16.msra.mxu0 0
        %1109 = vmatprep.subr.bf16.mxu0 0
        %1110 = vmatpush1.bf16.msra.mxu0 0
        %1111 = vmatprep.subr.bf16.mxu0 0
        %1112 = vmatpush1.bf16.msra.mxu0 0
        %1113 = vmatprep.subr.bf16.mxu0 0
        %1114 = vmatpush1.bf16.msra.mxu0 0
        %1115 = vmatprep.subr.bf16.mxu0 0
        %1116 = vmatpush1.bf16.msra.mxu0 0
        %1117 = vmatprep.subr.bf16.mxu0 0
        %1118 = vmatpush1.bf16.msra.mxu0 0
        %1119 = vmatprep.subr.bf16.mxu0 0
        %1120 = vmatpush1.bf16.msra.mxu0 0
        %1121 = vmatprep.subr.bf16.mxu0 0
        %1122 = vmatpush1.bf16.msra.mxu0 0
        %1123 = vmatprep.subr.bf16.mxu0 0
        %1124 = vmatpush1.bf16.msra.mxu0 0
        %1125 = vmatprep.subr.bf16.mxu0 0
        %1126 = vmatpush1.bf16.msra.mxu0 0
        %1127 = vmatprep.subr.bf16.mxu0 0
        %1128 = vmatpush1.bf16.msra.mxu0 0
        %1129 = vmatprep.subr.bf16.mxu0 0
        %1130 = vmatpush1.bf16.msra.mxu0 0
        %1131 = vmatprep.subr.bf16.mxu0 0
        %1132 = vmatpush1.bf16.msra.mxu0 0
        %1133 = vmatprep.subr.bf16.mxu0 0
        %1134 = vmatpush1.bf16.msra.mxu0 0
        %1135 = vmatprep.mubr.bf16.mxu0 0
        %1136 = vmatmul.mubr.bf16.gmra.mrb[0].mxu0 %v1098
        %v1137 = vpop.f32.mrb[0].mxu0
        %v1138 = vadd.f32 0.0, %v1137
        %v1139 = vpop.f32.mrb[0].mxu0
        %v1140 = vpop.f32.mrb[0].mxu0
        %v1141 = vadd.f32 0.0, %v1140
        %v1142 = vpop.f32.mrb[0].mxu0
        %1143 = vmatprep.mubr.bf16.mxu0 0
        %1144 = vmatmul.mubr.bf16.gmra.mrb[0].mxu0 %v1101
        %v1145 = vpop.f32.mrb[0].mxu0
        %v1146 = vadd.f32 0.0, %v1145
        %v1147 = vpop.f32.mrb[0].mxu0
        %v1148 = vpop.f32.mrb[0].mxu0
        %v1149 = vadd.f32 0.0, %v1148
        %v1150 = vpop.f32.mrb[0].mxu0
        %1151 = vdwg.mxu0
        %v1156 = vunpack.c.l.b16 %v1074
        %v1157 = vunpack.c.l.b16 %v1075
        %v1158 = vunpack.c.l.b16 %v1076
        %v1159 = vunpack.c.l.b16 %v1077
        %v1160 = vpack.c.b16 %v1157, %v1156
        %v1161 = vpack.c.b16 %v1159, %v1158
        %v1165 = vsel %vm876, %v1066, 0
        %v1168 = vsel %vm876, %v1067, 0
        %1170 = vmatprep.subr.bf16.mxu0 0
        %1171 = vmatpush1.bf16.msra.mxu0 %v1160
        %1172 = vmatprep.subr.bf16.mxu0 0
        %1173 = vmatpush1.bf16.msra.mxu0 %v1161
        %1174 = vmatprep.subr.bf16.mxu0 0
        %1175 = vmatpush1.bf16.msra.mxu0 0
        %1176 = vmatprep.subr.bf16.mxu0 0
        %1177 = vmatpush1.bf16.msra.mxu0 0
        %1178 = vmatprep.subr.bf16.mxu0 0
        %1179 = vmatpush1.bf16.msra.mxu0 0
        %1180 = vmatprep.subr.bf16.mxu0 0
        %1181 = vmatpush1.bf16.msra.mxu0 0
        %1182 = vmatprep.subr.bf16.mxu0 0
        %1183 = vmatpush1.bf16.msra.mxu0 0
        %1184 = vmatprep.subr.bf16.mxu0 0
        %1185 = vmatpush1.bf16.msra.mxu0 0
        %1186 = vmatprep.subr.bf16.mxu0 0
        %1187 = vmatpush1.bf16.msra.mxu0 0
        %1188 = vmatprep.subr.bf16.mxu0 0
        %1189 = vmatpush1.bf16.msra.mxu0 0
        %1190 = vmatprep.subr.bf16.mxu0 0
        %1191 = vmatpush1.bf16.msra.mxu0 0
        %1192 = vmatprep.subr.bf16.mxu0 0
        %1193 = vmatpush1.bf16.msra.mxu0 0
        %1194 = vmatprep.subr.bf16.mxu0 0
        %1195 = vmatpush1.bf16.msra.mxu0 0
        %1196 = vmatprep.subr.bf16.mxu0 0
        %1197 = vmatpush1.bf16.msra.mxu0 0
        %1198 = vmatprep.subr.bf16.mxu0 0
        %1199 = vmatpush1.bf16.msra.mxu0 0
        %1200 = vmatprep.subr.bf16.mxu0 0
        %1201 = vmatpush1.bf16.msra.mxu0 0
        %1202 = vmatprep.mubr.bf16.mxu0 0
        %1203 = vmatmul.mubr.bf16.gmra.mrb[0].mxu0 %v1165
        %v1204 = vpop.f32.mrb[0].mxu0
        %v1205 = vadd.f32 %v1138, %v1204
        %v1206 = vpop.f32.mrb[0].mxu0
        %v1207 = vpop.f32.mrb[0].mxu0
        %v1208 = vadd.f32 %v1141, %v1207
        %v1209 = vpop.f32.mrb[0].mxu0
        %1210 = vmatprep.mubr.bf16.mxu0 0
        %1211 = vmatmul.mubr.bf16.gmra.mrb[0].mxu0 %v1168
        %v1212 = vpop.f32.mrb[0].mxu0
        %v1213 = vadd.f32 %v1146, %v1212
        %v1214 = vpop.f32.mrb[0].mxu0
        %v1215 = vpop.f32.mrb[0].mxu0
        %v1216 = vadd.f32 %v1149, %v1215
        %v1217 = vpop.f32.mrb[0].mxu0
        %1218 = vdwg.mxu0
        %v1219 = vpack.c.bf16 %v1059, %v1058
        %v1220 = vpack.c.bf16 %v1061, %v1060
        %s1221 = scalar_lea.vmem [#allocation4], 32
        %v1222 = vld [vmem:[%s1221] sm:$0xf]
        %v1223 = vld [vmem:[%s1221 + $0x4] sm:$0xf]
        %v1224 = vld [vmem:[%s1221 + $0x8] sm:$0xf]
        %v1225 = vld [vmem:[%s1221 + $0xc] sm:$0xf]
        %v1230 = vunpack.c.l.b16 %v1222
        %v1231 = vunpack.c.l.b16 %v1223
        %v1232 = vunpack.c.l.b16 %v1224
        %v1233 = vunpack.c.l.b16 %v1225
        %v1234 = vpack.c.b16 %v1231, %v1230
        %v1235 = vpack.c.b16 %v1233, %v1232
        %v1239 = vsel %vm876, %v1219, 0
        %v1242 = vsel %vm876, %v1220, 0
        %1244 = vmatprep.subr.bf16.mxu0 0
        %1245 = vmatpush1.bf16.msra.mxu0 %v1234
        %1246 = vmatprep.subr.bf16.mxu0 0
        %1247 = vmatpush1.bf16.msra.mxu0 %v1235
        %1248 = vmatprep.subr.bf16.mxu0 0
        %1249 = vmatpush1.bf16.msra.mxu0 0
        %1250 = vmatprep.subr.bf16.mxu0 0
        %1251 = vmatpush1.bf16.msra.mxu0 0
        %1252 = vmatprep.subr.bf16.mxu0 0
        %1253 = vmatpush1.bf16.msra.mxu0 0
        %1254 = vmatprep.subr.bf16.mxu0 0
        %1255 = vmatpush1.bf16.msra.mxu0 0
        %1256 = vmatprep.subr.bf16.mxu0 0
        %1257 = vmatpush1.bf16.msra.mxu0 0
        %1258 = vmatprep.subr.bf16.mxu0 0
        %1259 = vmatpush1.bf16.msra.mxu0 0
        %1260 = vmatprep.subr.bf16.mxu0 0
        %1261 = vmatpush1.bf16.msra.mxu0 0
        %1262 = vmatprep.subr.bf16.mxu0 0
        %1263 = vmatpush1.bf16.msra.mxu0 0
        %1264 = vmatprep.subr.bf16.mxu0 0
        %1265 = vmatpush1.bf16.msra.mxu0 0
        %1266 = vmatprep.subr.bf16.mxu0 0
        %1267 = vmatpush1.bf16.msra.mxu0 0
        %1268 = vmatprep.subr.bf16.mxu0 0
        %1269 = vmatpush1.bf16.msra.mxu0 0
        %1270 = vmatprep.subr.bf16.mxu0 0
        %1271 = vmatpush1.bf16.msra.mxu0 0
        %1272 = vmatprep.subr.bf16.mxu0 0
        %1273 = vmatpush1.bf16.msra.mxu0 0
        %1274 = vmatprep.subr.bf16.mxu0 0
        %1275 = vmatpush1.bf16.msra.mxu0 0
        %1276 = vmatprep.mubr.bf16.mxu0 0
        %1277 = vmatmul.mubr.bf16.gmra.mrb[0].mxu0 %v1239
        %v1278 = vpop.f32.mrb[0].mxu0
        %v1279 = vadd.f32 0.0, %v1278
        %v1280 = vpop.f32.mrb[0].mxu0
        %v1281 = vpop.f32.mrb[0].mxu0
        %v1282 = vadd.f32 0.0, %v1281
        %v1283 = vpop.f32.mrb[0].mxu0
        %1284 = vmatprep.mubr.bf16.mxu0 0
        %1285 = vmatmul.mubr.bf16.gmra.mrb[0].mxu0 %v1242
        %v1286 = vpop.f32.mrb[0].mxu0
        %v1287 = vadd.f32 0.0, %v1286
        %v1288 = vpop.f32.mrb[0].mxu0
        %v1289 = vpop.f32.mrb[0].mxu0
        %v1290 = vadd.f32 0.0, %v1289
        %v1291 = vpop.f32.mrb[0].mxu0
        %1292 = vdwg.mxu0
        %v1293 = vadd.f32 %v1205, %v1279
        %v1294 = vadd.f32 %v1208, %v1282
        %v1295 = vadd.f32 %v1213, %v1287
        %v1296 = vadd.f32 %v1216, %v1290
        %s1297 = scalar_lea.vmem [#allocation4], 48
        %v1298 = vld [vmem:[%s1297] sm:$0xf]
        %v1299 = vld [vmem:[%s1297 + $0x4] sm:$0xf]
        %v1300 = vld [vmem:[%s1297 + $0x8] sm:$0xf]
        %v1301 = vld [vmem:[%s1297 + $0xc] sm:$0xf]
        %v1306 = vunpack.c.l.b16 %v1298
        %v1307 = vunpack.c.l.b16 %v1299
        %v1308 = vunpack.c.l.b16 %v1300
        %v1309 = vunpack.c.l.b16 %v1301
        %v1310 = vpack.c.b16 %v1307, %v1306
        %v1311 = vpack.c.b16 %v1309, %v1308
        %v1315 = vsel %vm876, %v1072, 0
        %v1318 = vsel %vm876, %v1073, 0
        %1320 = vmatprep.subr.bf16.mxu0 0
        %1321 = vmatpush1.bf16.msra.mxu0 %v1310
        %1322 = vmatprep.subr.bf16.mxu0 0
        %1323 = vmatpush1.bf16.msra.mxu0 %v1311
        %1324 = vmatprep.subr.bf16.mxu0 0
        %1325 = vmatpush1.bf16.msra.mxu0 0
        %1326 = vmatprep.subr.bf16.mxu0 0
        %1327 = vmatpush1.bf16.msra.mxu0 0
        %1328 = vmatprep.subr.bf16.mxu0 0
        %1329 = vmatpush1.bf16.msra.mxu0 0
        %1330 = vmatprep.subr.bf16.mxu0 0
        %1331 = vmatpush1.bf16.msra.mxu0 0
        %1332 = vmatprep.subr.bf16.mxu0 0
        %1333 = vmatpush1.bf16.msra.mxu0 0
        %1334 = vmatprep.subr.bf16.mxu0 0
        %1335 = vmatpush1.bf16.msra.mxu0 0
        %1336 = vmatprep.subr.bf16.mxu0 0
        %1337 = vmatpush1.bf16.msra.mxu0 0
        %1338 = vmatprep.subr.bf16.mxu0 0
        %1339 = vmatpush1.bf16.msra.mxu0 0
        %1340 = vmatprep.subr.bf16.mxu0 0
        %1341 = vmatpush1.bf16.msra.mxu0 0
        %1342 = vmatprep.subr.bf16.mxu0 0
        %1343 = vmatpush1.bf16.msra.mxu0 0
        %1344 = vmatprep.subr.bf16.mxu0 0
        %1345 = vmatpush1.bf16.msra.mxu0 0
        %1346 = vmatprep.subr.bf16.mxu0 0
        %1347 = vmatpush1.bf16.msra.mxu0 0
        %1348 = vmatprep.subr.bf16.mxu0 0
        %1349 = vmatpush1.bf16.msra.mxu0 0
        %1350 = vmatprep.subr.bf16.mxu0 0
        %1351 = vmatpush1.bf16.msra.mxu0 0
        %1352 = vmatprep.mubr.bf16.mxu0 0
        %1353 = vmatmul.mubr.bf16.gmra.mrb[0].mxu0 %v1315
        %v1354 = vpop.f32.mrb[0].mxu0
        %v1355 = vadd.f32 0.0, %v1354
        %v1356 = vpop.f32.mrb[0].mxu0
        %v1357 = vpop.f32.mrb[0].mxu0
        %v1358 = vadd.f32 0.0, %v1357
        %v1359 = vpop.f32.mrb[0].mxu0
        %1360 = vmatprep.mubr.bf16.mxu0 0
        %1361 = vmatmul.mubr.bf16.gmra.mrb[0].mxu0 %v1318
        %v1362 = vpop.f32.mrb[0].mxu0
        %v1363 = vadd.f32 0.0, %v1362
        %v1364 = vpop.f32.mrb[0].mxu0
        %v1365 = vpop.f32.mrb[0].mxu0
        %v1366 = vadd.f32 0.0, %v1365
        %v1367 = vpop.f32.mrb[0].mxu0
        %1368 = vdwg.mxu0
        %v1369 = vadd.f32 %v1293, %v1355
        %v1370 = vadd.f32 %v1294, %v1358
        %v1371 = vadd.f32 %v1295, %v1363
        %v1372 = vadd.f32 %v1296, %v1366
        %v1373 = vld [vmem:[%s4] sm:$0x1]
        %v1375 = vlaneseq
        %v1376 = vshrl.u32 %v1375, 7
        %v1377 = vsub.s32 0, %v1376
        %v1378 = vrot.slane %v1373, %v1377
        %v1380 = vadd.f32 %v1369, %v1378
        %v1381 = vadd.f32 %v1370, %v1378
        %v1382 = vadd.f32 %v1371, %v1378
        %v1383 = vadd.f32 %v1372, %v1378
        %v1384 = vadd.f32 %v1054, %v1058
        %v1385 = vadd.f32 %v1055, %v1059
        %v1386 = vadd.f32 %v1056, %v1060
        %v1387 = vadd.f32 %v1057, %v1061
        %v1388 = vmul.f32 %v1384, 0.5
        %v1389 = vmul.f32 %v1385, 0.5
        %v1390 = vmul.f32 %v1386, 0.5
        %v1391 = vmul.f32 %v1387, 0.5
        %v1392 = vxor.u32 %v1380, 2147483648
        %v1393 = vxor.u32 %v1381, 2147483648
        %v1394 = vxor.u32 %v1382, 2147483648
        %v1395 = vxor.u32 %v1383, 2147483648
        %v1396 = vmul.f32 %v1392, 1.442695
        %v1397 = vpow.pop %v1396
        %v1398 = vmul.f32 %v1393, 1.442695
        %v1399 = vpow.pop %v1398
        %v1400 = vmul.f32 %v1394, 1.442695
        %v1401 = vpow.pop %v1400
        %v1402 = vmul.f32 %v1395, 1.442695
        %v1403 = vpow.pop %v1402
        %v1404 = vadd.f32 %v1397, 1.0
        %v1405 = vadd.f32 %v1399, 1.0
        %v1406 = vadd.f32 %v1401, 1.0
        %v1407 = vadd.f32 %v1403, 1.0
        %v1408 = vrcp.pop %v1404
        %v1409 = vmul.f32 1.0, %v1408
        %v1410 = vrcp.pop %v1405
        %v1411 = vmul.f32 1.0, %v1410
        %v1412 = vrcp.pop %v1406
        %v1413 = vmul.f32 1.0, %v1412
        %v1414 = vrcp.pop %v1407
        %v1415 = vmul.f32 1.0, %v1414
        %1420 = vrot.lane.b32.xlu0 %v1409, 96
        %v1421 = vpop.permute.xlu0 %1420
        %1422 = vrot.lane.b32.xlu0 %v1411, 96
        %v1423 = vpop.permute.xlu0 %1422
        %1424 = vrot.lane.b32.xlu0 %v1413, 96
        %v1425 = vpop.permute.xlu0 %1424
        %1426 = vrot.lane.b32.xlu0 %v1415, 96
        %v1427 = vpop.permute.xlu0 %1426
        %v1432 = vmul.f32 %v1380, %v1421
        %v1433 = vmul.f32 %v1381, %v1423
        %v1434 = vmul.f32 %v1382, %v1425
        %v1435 = vmul.f32 %v1383, %v1427
        %v1436 = vadd.f32 %v1432, %v1388
        %v1437 = vadd.f32 %v1433, %v1389
        %v1438 = vadd.f32 %v1434, %v1390
        %v1439 = vadd.f32 %v1435, %v1391
        %v1444 = vcombine.high %v1436, %v1436
        %v1446 = vunpack.c.l.s4 1983009808
        %v1447 = vunpack.c.0.s8 %v1446
        %v1448 = vlaneseq
        %v1449 = vshrl.u32 %v1448, 7
        %v1450 = vsub.s32 %v1447, %v1449
        %v1451 = vrot.slane %v1436, %v1450
        %v1453 = vunpack.c.l.s4 1983009808
        %v1454 = vunpack.c.0.s8 %v1453
        %v1455 = vlaneseq
        %v1456 = vshrl.u32 %v1455, 7
        %v1457 = vsub.s32 %v1454, %v1456
        %v1458 = vrot.slane %v1444, %v1457
        %v1459 = vcombine.high %v1451, %v1451
        %v1460 = vcombine.high %v1458, %v1458
        %v1461 = vcombine.high %v1437, %v1437
        %v1463 = vunpack.c.l.s4 1983009808
        %v1464 = vunpack.c.0.s8 %v1463
        %v1465 = vlaneseq
        %v1466 = vshrl.u32 %v1465, 7
        %v1467 = vsub.s32 %v1464, %v1466
        %v1468 = vrot.slane %v1437, %v1467
        %v1470 = vunpack.c.l.s4 1983009808
        %v1471 = vunpack.c.0.s8 %v1470
        %v1472 = vlaneseq
        %v1473 = vshrl.u32 %v1472, 7
        %v1474 = vsub.s32 %v1471, %v1473
        %v1475 = vrot.slane %v1461, %v1474
        %v1476 = vcombine.high %v1468, %v1468
        %v1477 = vcombine.high %v1475, %v1475
        %v1478 = vcombine.high %v1438, %v1438
        %v1480 = vunpack.c.l.s4 1983009808
        %v1481 = vunpack.c.0.s8 %v1480
        %v1482 = vlaneseq
        %v1483 = vshrl.u32 %v1482, 7
        %v1484 = vsub.s32 %v1481, %v1483
        %v1485 = vrot.slane %v1438, %v1484
        %v1487 = vunpack.c.l.s4 1983009808
        %v1488 = vunpack.c.0.s8 %v1487
        %v1489 = vlaneseq
        %v1490 = vshrl.u32 %v1489, 7
        %v1491 = vsub.s32 %v1488, %v1490
        %v1492 = vrot.slane %v1478, %v1491
        %v1493 = vcombine.high %v1485, %v1485
        %v1494 = vcombine.high %v1492, %v1492
        %v1495 = vcombine.high %v1439, %v1439
        %v1497 = vunpack.c.l.s4 1983009808
        %v1498 = vunpack.c.0.s8 %v1497
        %v1499 = vlaneseq
        %v1500 = vshrl.u32 %v1499, 7
        %v1501 = vsub.s32 %v1498, %v1500
        %v1502 = vrot.slane %v1439, %v1501
        %v1504 = vunpack.c.l.s4 1983009808
        %v1505 = vunpack.c.0.s8 %v1504
        %v1506 = vlaneseq
        %v1507 = vshrl.u32 %v1506, 7
        %v1508 = vsub.s32 %v1505, %v1507
        %v1509 = vrot.slane %v1495, %v1508
        %v1510 = vcombine.high %v1502, %v1502
        %v1511 = vcombine.high %v1509, %v1509
        %v1512 = vlaneseq
        %v1513 = vshrl.u32 %v1512, 7
        %v1514 = vsub.s32 0, %v1513
        %v1515 = vrot.slane %v1451, %v1514
        %v1516 = vlaneseq
        %v1517 = vshrl.u32 %v1516, 7
        %v1518 = vsub.s32 0, %v1517
        %v1519 = vrot.slane %v1459, %v1518
        %v1520 = vlaneseq
        %v1521 = vshrl.u32 %v1520, 7
        %v1522 = vsub.s32 0, %v1521
        %v1523 = vrot.slane %v1458, %v1522
        %v1524 = vlaneseq
        %v1525 = vshrl.u32 %v1524, 7
        %v1526 = vsub.s32 0, %v1525
        %v1527 = vrot.slane %v1460, %v1526
        %v1528 = vlaneseq
        %v1529 = vshrl.u32 %v1528, 7
        %v1530 = vsub.s32 0, %v1529
        %v1531 = vrot.slane %v1468, %v1530
        %v1532 = vlaneseq
        %v1533 = vshrl.u32 %v1532, 7
        %v1534 = vsub.s32 0, %v1533
        %v1535 = vrot.slane %v1476, %v1534
        %v1536 = vlaneseq
        %v1537 = vshrl.u32 %v1536, 7
        %v1538 = vsub.s32 0, %v1537
        %v1539 = vrot.slane %v1475, %v1538
        %v1540 = vlaneseq
        %v1541 = vshrl.u32 %v1540, 7
        %v1542 = vsub.s32 0, %v1541
        %v1543 = vrot.slane %v1477, %v1542
        %v1544 = vlaneseq
        %v1545 = vshrl.u32 %v1544, 7
        %v1546 = vsub.s32 0, %v1545
        %v1547 = vrot.slane %v1485, %v1546
        %v1548 = vlaneseq
        %v1549 = vshrl.u32 %v1548, 7
        %v1550 = vsub.s32 0, %v1549
        %v1551 = vrot.slane %v1493, %v1550
        %v1552 = vlaneseq
        %v1553 = vshrl.u32 %v1552, 7
        %v1554 = vsub.s32 0, %v1553
        %v1555 = vrot.slane %v1492, %v1554
        %v1556 = vlaneseq
        %v1557 = vshrl.u32 %v1556, 7
        %v1558 = vsub.s32 0, %v1557
        %v1559 = vrot.slane %v1494, %v1558
        %v1560 = vlaneseq
        %v1561 = vshrl.u32 %v1560, 7
        %v1562 = vsub.s32 0, %v1561
        %v1563 = vrot.slane %v1502, %v1562
        %v1564 = vlaneseq
        %v1565 = vshrl.u32 %v1564, 7
        %v1566 = vsub.s32 0, %v1565
        %v1567 = vrot.slane %v1510, %v1566
        %v1568 = vlaneseq
        %v1569 = vshrl.u32 %v1568, 7
        %v1570 = vsub.s32 0, %v1569
        %v1571 = vrot.slane %v1509, %v1570
        %v1572 = vlaneseq
        %v1573 = vshrl.u32 %v1572, 7
        %v1574 = vsub.s32 0, %v1573
        %v1575 = vrot.slane %v1511, %v1574
        %v1576 = vsel %vm837, %v1519, %v1515
        %v1577 = vsel %vm839, %v1523, %v1576
        %v1578 = vsel %vm841, %v1527, %v1577
        %v1579 = vsel %vm837, %v1535, %v1531
        %v1580 = vsel %vm839, %v1539, %v1579
        %v1581 = vsel %vm841, %v1543, %v1580
        %v1582 = vsel %vm837, %v1551, %v1547
        %v1583 = vsel %vm839, %v1555, %v1582
        %v1584 = vsel %vm841, %v1559, %v1583
        %v1585 = vsel %vm837, %v1567, %v1563
        %v1586 = vsel %vm839, %v1571, %v1585
        %v1587 = vsel %vm841, %v1575, %v1586
        %vm1592 = vcmask 257024
        %1593 = vst.msk [vmem:[#allocation2] sm:$0xf] %vm1592, %v1578
        %1594 = vst.msk [vmem:[#allocation2 + $0x10] sm:$0xf] %vm1592, %v1581
        %1595 = vst.msk [vmem:[#allocation2 + $0x20] sm:$0xf] %vm1592, %v1584
        %1596 = vst.msk [vmem:[#allocation2 + $0x30] sm:$0xf] %vm1592, %v1587
        %1597 = vst.msk [vmem:[#allocation2 + $0x4] sm:$0x1] %vm560, 0.0
        %1598 = vst.msk [vmem:[#allocation2 + $0x14] sm:$0x1] %vm560, 0.0
        %1599 = vst.msk [vmem:[#allocation2 + $0x24] sm:$0x1] %vm560, 0.0
        %1600 = vst.msk [vmem:[#allocation2 + $0x34] sm:$0x1] %vm560, 0.0
        %v1601 = vlaneseq
        %v1602 = vshrl.u32 %v1601, 7
        %v1603 = vsub.s32 1, %v1602
        %v1604 = vrot.slane %v1451, %v1603
        %v1605 = vlaneseq
        %v1606 = vshrl.u32 %v1605, 7
        %v1607 = vsub.s32 1, %v1606
        %v1608 = vrot.slane %v1459, %v1607
        %v1609 = vlaneseq
        %v1610 = vshrl.u32 %v1609, 7
        %v1611 = vsub.s32 1, %v1610
        %v1612 = vrot.slane %v1458, %v1611
        %v1613 = vlaneseq
        %v1614 = vshrl.u32 %v1613, 7
        %v1615 = vsub.s32 1, %v1614
        %v1616 = vrot.slane %v1460, %v1615
        %v1617 = vlaneseq
        %v1618 = vshrl.u32 %v1617, 7
        %v1619 = vsub.s32 1, %v1618
        %v1620 = vrot.slane %v1468, %v1619
        %v1621 = vlaneseq
        %v1622 = vshrl.u32 %v1621, 7
        %v1623 = vsub.s32 1, %v1622
        %v1624 = vrot.slane %v1476, %v1623
        %v1625 = vlaneseq
        %v1626 = vshrl.u32 %v1625, 7
        %v1627 = vsub.s32 1, %v1626
        %v1628 = vrot.slane %v1475, %v1627
        %v1629 = vlaneseq
        %v1630 = vshrl.u32 %v1629, 7
        %v1631 = vsub.s32 1, %v1630
        %v1632 = vrot.slane %v1477, %v1631
        %v1633 = vlaneseq
        %v1634 = vshrl.u32 %v1633, 7
        %v1635 = vsub.s32 1, %v1634
        %v1636 = vrot.slane %v1485, %v1635
        %v1637 = vlaneseq
        %v1638 = vshrl.u32 %v1637, 7
        %v1639 = vsub.s32 1, %v1638
        %v1640 = vrot.slane %v1493, %v1639
        %v1641 = vlaneseq
        %v1642 = vshrl.u32 %v1641, 7
        %v1643 = vsub.s32 1, %v1642
        %v1644 = vrot.slane %v1492, %v1643
        %v1645 = vlaneseq
        %v1646 = vshrl.u32 %v1645, 7
        %v1647 = vsub.s32 1, %v1646
        %v1648 = vrot.slane %v1494, %v1647
        %v1649 = vlaneseq
        %v1650 = vshrl.u32 %v1649, 7
        %v1651 = vsub.s32 1, %v1650
        %v1652 = vrot.slane %v1502, %v1651
        %v1653 = vlaneseq
        %v1654 = vshrl.u32 %v1653, 7
        %v1655 = vsub.s32 1, %v1654
        %v1656 = vrot.slane %v1510, %v1655
        %v1657 = vlaneseq
        %v1658 = vshrl.u32 %v1657, 7
        %v1659 = vsub.s32 1, %v1658
        %v1660 = vrot.slane %v1509, %v1659
        %v1661 = vlaneseq
        %v1662 = vshrl.u32 %v1661, 7
        %v1663 = vsub.s32 1, %v1662
        %v1664 = vrot.slane %v1511, %v1663
        %v1665 = vsel %vm839, %v1608, %v1604
        %v1666 = vsel %vm841, %v1612, %v1665
        %v1667 = vsel %vm843, %v1616, %v1666
        %v1668 = vsel %vm839, %v1624, %v1620
        %v1669 = vsel %vm841, %v1628, %v1668
        %v1670 = vsel %vm843, %v1632, %v1669
        %v1671 = vsel %vm839, %v1640, %v1636
        %v1672 = vsel %vm841, %v1644, %v1671
        %v1673 = vsel %vm843, %v1648, %v1672
        %v1674 = vsel %vm839, %v1656, %v1652
        %v1675 = vsel %vm841, %v1660, %v1674
        %v1676 = vsel %vm843, %v1664, %v1675
        %vm1681 = vcmask 258049
        %1682 = vst.msk [vmem:[#allocation3] sm:$0x1e] %vm1681, %v1667
        %1683 = vst.msk [vmem:[#allocation3 + $0x10] sm:$0x1e] %vm1681, %v1670
        %1684 = vst.msk [vmem:[#allocation3 + $0x20] sm:$0x1e] %vm1681, %v1673
        %1685 = vst.msk [vmem:[#allocation3 + $0x30] sm:$0x1e] %vm1681, %v1676
        %v1686 = vld [vmem:[#allocation2] sm:$0xf]
        %v1687 = vld [vmem:[#allocation2 + $0x10] sm:$0xf]
        %v1688 = vld [vmem:[#allocation2 + $0x20] sm:$0xf]
        %v1689 = vld [vmem:[#allocation2 + $0x30] sm:$0xf]
        %v1690 = vld [vmem:[#allocation3 + $0x1] sm:$0xf]
        %v1691 = vld [vmem:[#allocation3 + $0x11] sm:$0xf]
        %v1692 = vld [vmem:[#allocation3 + $0x21] sm:$0xf]
        %v1693 = vld [vmem:[#allocation3 + $0x31] sm:$0xf]
        %v1694 = vld [vmem:[#allocation3] sm:$0xf]
        %v1695 = vld [vmem:[#allocation3 + $0x10] sm:$0xf]
        %v1696 = vld [vmem:[#allocation3 + $0x20] sm:$0xf]
        %v1697 = vld [vmem:[#allocation3 + $0x30] sm:$0xf]
        %v1702 = vcombine.low %v1694, %v1695
        %v1703 = vcombine.low %v1696, %v1697
        %v1706 = vpack.c.bf16 %v1703, %v1702
        %v1707 = vld [vmem:[#allocation2 + $0x1] sm:$0xf]
        %v1708 = vld [vmem:[#allocation2 + $0x11] sm:$0xf]
        %v1709 = vld [vmem:[#allocation2 + $0x21] sm:$0xf]
        %v1710 = vld [vmem:[#allocation2 + $0x31] sm:$0xf]
        %v1715 = vcombine.low %v1707, %v1708
        %v1716 = vcombine.low %v1709, %v1710
        %v1719 = vpack.c.bf16 %v1716, %v1715
        %s1720 = scalar_lea.vmem [#allocation4], 64
        %v1721 = vld [vmem:[%s1720] sm:$0xf]
        %v1722 = vld [vmem:[%s1720 + $0x4] sm:$0xf]
        %v1723 = vld [vmem:[%s1720 + $0x8] sm:$0xf]
        %v1724 = vld [vmem:[%s1720 + $0xc] sm:$0xf]
        %v1729 = vcombine.low %v1686, %v1687
        %v1730 = vcombine.low %v1688, %v1689
        %v1733 = vpack.c.bf16 %v1730, %v1729
        %s1734 = scalar_lea.vmem [#allocation4], 80
        %v1735 = vld [vmem:[%s1734] sm:$0xf]
        %v1736 = vld [vmem:[%s1734 + $0x4] sm:$0xf]
        %v1737 = vld [vmem:[%s1734 + $0x8] sm:$0xf]
        %v1738 = vld [vmem:[%s1734 + $0xc] sm:$0xf]
        %v1743 = vunpack.c.l.b16 %v1735
        %v1744 = vunpack.c.l.b16 %v1736
        %v1745 = vunpack.c.l.b16 %v1737
        %v1746 = vunpack.c.l.b16 %v1738
        %v1747 = vpack.c.b16 %v1744, %v1743
        %v1748 = vpack.c.b16 %v1746, %v1745
        %v1752 = vsel %vm876, %v1733, 0
        %1754 = vmatprep.subr.bf16.mxu0 0
        %1755 = vmatpush1.bf16.msra.mxu0 %v1747
        %1756 = vmatprep.subr.bf16.mxu0 0
        %1757 = vmatpush1.bf16.msra.mxu0 %v1748
        %1758 = vmatprep.subr.bf16.mxu0 0
        %1759 = vmatpush1.bf16.msra.mxu0 0
        %1760 = vmatprep.subr.bf16.mxu0 0
        %1761 = vmatpush1.bf16.msra.mxu0 0
        %1762 = vmatprep.subr.bf16.mxu0 0
        %1763 = vmatpush1.bf16.msra.mxu0 0
        %1764 = vmatprep.subr.bf16.mxu0 0
        %1765 = vmatpush1.bf16.msra.mxu0 0
        %1766 = vmatprep.subr.bf16.mxu0 0
        %1767 = vmatpush1.bf16.msra.mxu0 0
        %1768 = vmatprep.subr.bf16.mxu0 0
        %1769 = vmatpush1.bf16.msra.mxu0 0
        %1770 = vmatprep.subr.bf16.mxu0 0
        %1771 = vmatpush1.bf16.msra.mxu0 0
        %1772 = vmatprep.subr.bf16.mxu0 0
        %1773 = vmatpush1.bf16.msra.mxu0 0
        %1774 = vmatprep.subr.bf16.mxu0 0
        %1775 = vmatpush1.bf16.msra.mxu0 0
        %1776 = vmatprep.subr.bf16.mxu0 0
        %1777 = vmatpush1.bf16.msra.mxu0 0
        %1778 = vmatprep.subr.bf16.mxu0 0
        %1779 = vmatpush1.bf16.msra.mxu0 0
        %1780 = vmatprep.subr.bf16.mxu0 0
        %1781 = vmatpush1.bf16.msra.mxu0 0
        %1782 = vmatprep.subr.bf16.mxu0 0
        %1783 = vmatpush1.bf16.msra.mxu0 0
        %1784 = vmatprep.subr.bf16.mxu0 0
        %1785 = vmatpush1.bf16.msra.mxu0 0
        %1786 = vmatprep.mubr.bf16.mxu0 0
        %1787 = vmatmul.mubr.bf16.gmra.mrb[0].mxu0 %v1752
        %v1788 = vpop.f32.mrb[0].mxu0
        %v1789 = vadd.f32 0.0, %v1788
        %v1790 = vpop.f32.mrb[0].mxu0
        %v1791 = vpop.f32.mrb[0].mxu0
        %v1792 = vadd.f32 0.0, %v1791
        %v1793 = vpop.f32.mrb[0].mxu0
        %1794 = vdwg.mxu0
        %v1799 = vunpack.c.l.b16 %v1721
        %v1800 = vunpack.c.l.b16 %v1722
        %v1801 = vunpack.c.l.b16 %v1723
        %v1802 = vunpack.c.l.b16 %v1724
        %v1803 = vpack.c.b16 %v1800, %v1799
        %v1804 = vpack.c.b16 %v1802, %v1801
        %v1808 = vsel %vm876, %v1706, 0
        %1810 = vmatprep.subr.bf16.mxu0 0
        %1811 = vmatpush1.bf16.msra.mxu0 %v1803
        %1812 = vmatprep.subr.bf16.mxu0 0
        %1813 = vmatpush1.bf16.msra.mxu0 %v1804
        %1814 = vmatprep.subr.bf16.mxu0 0
        %1815 = vmatpush1.bf16.msra.mxu0 0
        %1816 = vmatprep.subr.bf16.mxu0 0
        %1817 = vmatpush1.bf16.msra.mxu0 0
        %1818 = vmatprep.subr.bf16.mxu0 0
        %1819 = vmatpush1.bf16.msra.mxu0 0
        %1820 = vmatprep.subr.bf16.mxu0 0
        %1821 = vmatpush1.bf16.msra.mxu0 0
        %1822 = vmatprep.subr.bf16.mxu0 0
        %1823 = vmatpush1.bf16.msra.mxu0 0
        %1824 = vmatprep.subr.bf16.mxu0 0
        %1825 = vmatpush1.bf16.msra.mxu0 0
        %1826 = vmatprep.subr.bf16.mxu0 0
        %1827 = vmatpush1.bf16.msra.mxu0 0
        %1828 = vmatprep.subr.bf16.mxu0 0
        %1829 = vmatpush1.bf16.msra.mxu0 0
        %1830 = vmatprep.subr.bf16.mxu0 0
        %1831 = vmatpush1.bf16.msra.mxu0 0
        %1832 = vmatprep.subr.bf16.mxu0 0
        %1833 = vmatpush1.bf16.msra.mxu0 0
        %1834 = vmatprep.subr.bf16.mxu0 0
        %1835 = vmatpush1.bf16.msra.mxu0 0
        %1836 = vmatprep.subr.bf16.mxu0 0
        %1837 = vmatpush1.bf16.msra.mxu0 0
        %1838 = vmatprep.subr.bf16.mxu0 0
        %1839 = vmatpush1.bf16.msra.mxu0 0
        %1840 = vmatprep.subr.bf16.mxu0 0
        %1841 = vmatpush1.bf16.msra.mxu0 0
        %1842 = vmatprep.mubr.bf16.mxu0 0
        %1843 = vmatmul.mubr.bf16.gmra.mrb[0].mxu0 %v1808
        %v1844 = vpop.f32.mrb[0].mxu0
        %v1845 = vadd.f32 %v1789, %v1844
        %v1846 = vpop.f32.mrb[0].mxu0
        %v1847 = vpop.f32.mrb[0].mxu0
        %v1848 = vadd.f32 %v1792, %v1847
        %v1849 = vpop.f32.mrb[0].mxu0
        %1850 = vdwg.mxu0
        %v1855 = vcombine.low %v1690, %v1691
        %v1856 = vcombine.low %v1692, %v1693
        %v1859 = vpack.c.bf16 %v1856, %v1855
        %s1860 = scalar_lea.vmem [#allocation4], 96
        %v1861 = vld [vmem:[%s1860] sm:$0xf]
        %v1862 = vld [vmem:[%s1860 + $0x4] sm:$0xf]
        %v1863 = vld [vmem:[%s1860 + $0x8] sm:$0xf]
        %v1864 = vld [vmem:[%s1860 + $0xc] sm:$0xf]
        %v1869 = vunpack.c.l.b16 %v1861
        %v1870 = vunpack.c.l.b16 %v1862
        %v1871 = vunpack.c.l.b16 %v1863
        %v1872 = vunpack.c.l.b16 %v1864
        %v1873 = vpack.c.b16 %v1870, %v1869
        %v1874 = vpack.c.b16 %v1872, %v1871
        %v1878 = vsel %vm876, %v1859, 0
        %1880 = vmatprep.subr.bf16.mxu0 0
        %1881 = vmatpush1.bf16.msra.mxu0 %v1873
        %1882 = vmatprep.subr.bf16.mxu0 0
        %1883 = vmatpush1.bf16.msra.mxu0 %v1874
        %1884 = vmatprep.subr.bf16.mxu0 0
        %1885 = vmatpush1.bf16.msra.mxu0 0
        %1886 = vmatprep.subr.bf16.mxu0 0
        %1887 = vmatpush1.bf16.msra.mxu0 0
        %1888 = vmatprep.subr.bf16.mxu0 0
        %1889 = vmatpush1.bf16.msra.mxu0 0
        %1890 = vmatprep.subr.bf16.mxu0 0
        %1891 = vmatpush1.bf16.msra.mxu0 0
        %1892 = vmatprep.subr.bf16.mxu0 0
        %1893 = vmatpush1.bf16.msra.mxu0 0
        %1894 = vmatprep.subr.bf16.mxu0 0
        %1895 = vmatpush1.bf16.msra.mxu0 0
        %1896 = vmatprep.subr.bf16.mxu0 0
        %1897 = vmatpush1.bf16.msra.mxu0 0
        %1898 = vmatprep.subr.bf16.mxu0 0
        %1899 = vmatpush1.bf16.msra.mxu0 0
        %1900 = vmatprep.subr.bf16.mxu0 0
        %1901 = vmatpush1.bf16.msra.mxu0 0
        %1902 = vmatprep.subr.bf16.mxu0 0
        %1903 = vmatpush1.bf16.msra.mxu0 0
        %1904 = vmatprep.subr.bf16.mxu0 0
        %1905 = vmatpush1.bf16.msra.mxu0 0
        %1906 = vmatprep.subr.bf16.mxu0 0
        %1907 = vmatpush1.bf16.msra.mxu0 0
        %1908 = vmatprep.subr.bf16.mxu0 0
        %1909 = vmatpush1.bf16.msra.mxu0 0
        %1910 = vmatprep.subr.bf16.mxu0 0
        %1911 = vmatpush1.bf16.msra.mxu0 0
        %1912 = vmatprep.mubr.bf16.mxu0 0
        %1913 = vmatmul.mubr.bf16.gmra.mrb[0].mxu0 %v1878
        %v1914 = vpop.f32.mrb[0].mxu0
        %v1915 = vadd.f32 0.0, %v1914
        %v1916 = vpop.f32.mrb[0].mxu0
        %v1917 = vpop.f32.mrb[0].mxu0
        %v1918 = vadd.f32 0.0, %v1917
        %v1919 = vpop.f32.mrb[0].mxu0
        %1920 = vdwg.mxu0
        %v1921 = vadd.f32 %v1845, %v1915
        %v1922 = vadd.f32 %v1848, %v1918
        %s1923 = scalar_lea.vmem [#allocation4], 112
        %v1924 = vld [vmem:[%s1923] sm:$0xf]
        %v1925 = vld [vmem:[%s1923 + $0x4] sm:$0xf]
        %v1926 = vld [vmem:[%s1923 + $0x8] sm:$0xf]
        %v1927 = vld [vmem:[%s1923 + $0xc] sm:$0xf]
        %v1932 = vunpack.c.l.b16 %v1924
        %v1933 = vunpack.c.l.b16 %v1925
        %v1934 = vunpack.c.l.b16 %v1926
        %v1935 = vunpack.c.l.b16 %v1927
        %v1936 = vpack.c.b16 %v1933, %v1932
        %v1937 = vpack.c.b16 %v1935, %v1934
        %v1941 = vsel %vm876, %v1719, 0
        %1943 = vmatprep.subr.bf16.mxu0 0
        %1944 = vmatpush1.bf16.msra.mxu0 %v1936
        %1945 = vmatprep.subr.bf16.mxu0 0
        %1946 = vmatpush1.bf16.msra.mxu0 %v1937
        %1947 = vmatprep.subr.bf16.mxu0 0
        %1948 = vmatpush1.bf16.msra.mxu0 0
        %1949 = vmatprep.subr.bf16.mxu0 0
        %1950 = vmatpush1.bf16.msra.mxu0 0
        %1951 = vmatprep.subr.bf16.mxu0 0
        %1952 = vmatpush1.bf16.msra.mxu0 0
        %1953 = vmatprep.subr.bf16.mxu0 0
        %1954 = vmatpush1.bf16.msra.mxu0 0
        %1955 = vmatprep.subr.bf16.mxu0 0
        %1956 = vmatpush1.bf16.msra.mxu0 0
        %1957 = vmatprep.subr.bf16.mxu0 0
        %1958 = vmatpush1.bf16.msra.mxu0 0
        %1959 = vmatprep.subr.bf16.mxu0 0
        %1960 = vmatpush1.bf16.msra.mxu0 0
        %1961 = vmatprep.subr.bf16.mxu0 0
        %1962 = vmatpush1.bf16.msra.mxu0 0
        %1963 = vmatprep.subr.bf16.mxu0 0
        %1964 = vmatpush1.bf16.msra.mxu0 0
        %1965 = vmatprep.subr.bf16.mxu0 0
        %1966 = vmatpush1.bf16.msra.mxu0 0
        %1967 = vmatprep.subr.bf16.mxu0 0
        %1968 = vmatpush1.bf16.msra.mxu0 0
        %1969 = vmatprep.subr.bf16.mxu0 0
        %1970 = vmatpush1.bf16.msra.mxu0 0
        %1971 = vmatprep.subr.bf16.mxu0 0
        %1972 = vmatpush1.bf16.msra.mxu0 0
        %1973 = vmatprep.subr.bf16.mxu0 0
        %1974 = vmatpush1.bf16.msra.mxu0 0
        %1975 = vmatprep.mubr.bf16.mxu0 0
        %1976 = vmatmul.mubr.bf16.gmra.mrb[0].mxu0 %v1941
        %v1977 = vpop.f32.mrb[0].mxu0
        %v1978 = vadd.f32 0.0, %v1977
        %v1979 = vpop.f32.mrb[0].mxu0
        %v1980 = vpop.f32.mrb[0].mxu0
        %v1981 = vadd.f32 0.0, %v1980
        %v1982 = vpop.f32.mrb[0].mxu0
        %1983 = vdwg.mxu0
        %v1984 = vadd.f32 %v1921, %v1978
        %v1985 = vadd.f32 %v1922, %v1981
        %s1986 = scalar_lea.vmem %s4, 1
        %v1987 = vld [vmem:[%s1986] sm:$0x1]
        %v1989 = vlaneseq
        %v1990 = vshrl.u32 %v1989, 7
        %v1991 = vsub.s32 0, %v1990
        %v1992 = vrot.slane %v1987, %v1991
        %v1994 = vadd.f32 %v1984, %v1992
        %v1995 = vadd.f32 %v1985, %v1992
        %v1996 = vadd.f32 %v1686, %v1690
        %v1997 = vadd.f32 %v1687, %v1691
        %v1998 = vadd.f32 %v1688, %v1692
        %v1999 = vadd.f32 %v1689, %v1693
        %v2000 = vmul.f32 %v1996, 0.5
        %v2001 = vmul.f32 %v1997, 0.5
        %v2002 = vmul.f32 %v1998, 0.5
        %v2003 = vmul.f32 %v1999, 0.5
        %v2004 = vxor.u32 %v1994, 2147483648
        %v2005 = vxor.u32 %v1995, 2147483648
        %v2006 = vmul.f32 %v2004, 1.442695
        %v2007 = vpow.pop %v2006
        %v2008 = vmul.f32 %v2005, 1.442695
        %v2009 = vpow.pop %v2008
        %v2010 = vadd.f32 %v2007, 1.0
        %v2011 = vadd.f32 %v2009, 1.0
        %v2012 = vrcp.pop %v2010
        %v2013 = vmul.f32 1.0, %v2012
        %v2014 = vrcp.pop %v2011
        %v2015 = vmul.f32 1.0, %v2014
        %2018 = vrot.lane.b32.xlu0 %v2013, 96
        %v2019 = vpop.permute.xlu0 %2018
        %2020 = vrot.lane.b32.xlu0 %v2015, 96
        %v2021 = vpop.permute.xlu0 %2020
        %v2024 = vmul.f32 %v1994, %v2019
        %v2025 = vmul.f32 %v1995, %v2021
        %v2030 = vcombine.low %v2000, %v2001
        %v2031 = vcombine.low %v2002, %v2003
        %v2034 = vadd.f32 %v2024, %v2030
        %v2035 = vadd.f32 %v2025, %v2031
        %v2038 = vcombine.high %v2034, %v2034
        %v2040 = vunpack.c.l.s4 1983009808
        %v2041 = vunpack.c.0.s8 %v2040
        %v2042 = vlaneseq
        %v2043 = vshrl.u32 %v2042, 7
        %v2044 = vsub.s32 %v2041, %v2043
        %v2045 = vrot.slane %v2034, %v2044
        %v2047 = vunpack.c.l.s4 1983009808
        %v2048 = vunpack.c.0.s8 %v2047
        %v2049 = vlaneseq
        %v2050 = vshrl.u32 %v2049, 7
        %v2051 = vsub.s32 %v2048, %v2050
        %v2052 = vrot.slane %v2038, %v2051
        %v2053 = vcombine.high %v2045, %v2045
        %v2054 = vcombine.high %v2052, %v2052
        %v2055 = vcombine.high %v2035, %v2035
        %v2057 = vunpack.c.l.s4 1983009808
        %v2058 = vunpack.c.0.s8 %v2057
        %v2059 = vlaneseq
        %v2060 = vshrl.u32 %v2059, 7
        %v2061 = vsub.s32 %v2058, %v2060
        %v2062 = vrot.slane %v2035, %v2061
        %v2064 = vunpack.c.l.s4 1983009808
        %v2065 = vunpack.c.0.s8 %v2064
        %v2066 = vlaneseq
        %v2067 = vshrl.u32 %v2066, 7
        %v2068 = vsub.s32 %v2065, %v2067
        %v2069 = vrot.slane %v2055, %v2068
        %v2070 = vcombine.high %v2062, %v2062
        %v2071 = vcombine.high %v2069, %v2069
        %v2072 = vlaneseq
        %v2073 = vshrl.u32 %v2072, 7
        %v2074 = vsub.s32 0, %v2073
        %v2075 = vrot.slane %v2045, %v2074
        %v2076 = vlaneseq
        %v2077 = vshrl.u32 %v2076, 7
        %v2078 = vsub.s32 0, %v2077
        %v2079 = vrot.slane %v2053, %v2078
        %v2080 = vlaneseq
        %v2081 = vshrl.u32 %v2080, 7
        %v2082 = vsub.s32 0, %v2081
        %v2083 = vrot.slane %v2052, %v2082
        %v2084 = vlaneseq
        %v2085 = vshrl.u32 %v2084, 7
        %v2086 = vsub.s32 0, %v2085
        %v2087 = vrot.slane %v2054, %v2086
        %v2088 = vlaneseq
        %v2089 = vshrl.u32 %v2088, 7
        %v2090 = vsub.s32 0, %v2089
        %v2091 = vrot.slane %v2062, %v2090
        %v2092 = vlaneseq
        %v2093 = vshrl.u32 %v2092, 7
        %v2094 = vsub.s32 0, %v2093
        %v2095 = vrot.slane %v2070, %v2094
        %v2096 = vlaneseq
        %v2097 = vshrl.u32 %v2096, 7
        %v2098 = vsub.s32 0, %v2097
        %v2099 = vrot.slane %v2069, %v2098
        %v2100 = vlaneseq
        %v2101 = vshrl.u32 %v2100, 7
        %v2102 = vsub.s32 0, %v2101
        %v2103 = vrot.slane %v2071, %v2102
        %v2104 = vsel %vm837, %v2079, %v2075
        %v2105 = vsel %vm837, %v2087, %v2083
        %v2106 = vsel %vm837, %v2095, %v2091
        %v2107 = vsel %vm837, %v2103, %v2099
        %vm2112 = vcmask 254976
        %2113 = vst.msk [vmem:[#allocation2] sm:$0x3] %vm2112, %v2104
        %2114 = vst.msk [vmem:[#allocation2 + $0x10] sm:$0x3] %vm2112, %v2105
        %2115 = vst.msk [vmem:[#allocation2 + $0x20] sm:$0x3] %vm2112, %v2106
        %2116 = vst.msk [vmem:[#allocation2 + $0x30] sm:$0x3] %vm2112, %v2107
        %2117 = vst.msk [vmem:[#allocation2 + $0x2] sm:$0x1] %vm560, 0.0
        %2118 = vst.msk [vmem:[#allocation2 + $0x12] sm:$0x1] %vm560, 0.0
        %2119 = vst.msk [vmem:[#allocation2 + $0x22] sm:$0x1] %vm560, 0.0
        %2120 = vst.msk [vmem:[#allocation2 + $0x32] sm:$0x1] %vm560, 0.0
        %v2121 = vlaneseq
        %v2122 = vshrl.u32 %v2121, 7
        %v2123 = vsub.s32 1, %v2122
        %v2124 = vrot.slane %v2045, %v2123
        %v2125 = vlaneseq
        %v2126 = vshrl.u32 %v2125, 7
        %v2127 = vsub.s32 1, %v2126
        %v2128 = vrot.slane %v2053, %v2127
        %v2129 = vlaneseq
        %v2130 = vshrl.u32 %v2129, 7
        %v2131 = vsub.s32 1, %v2130
        %v2132 = vrot.slane %v2052, %v2131
        %v2133 = vlaneseq
        %v2134 = vshrl.u32 %v2133, 7
        %v2135 = vsub.s32 1, %v2134
        %v2136 = vrot.slane %v2054, %v2135
        %v2137 = vlaneseq
        %v2138 = vshrl.u32 %v2137, 7
        %v2139 = vsub.s32 1, %v2138
        %v2140 = vrot.slane %v2062, %v2139
        %v2141 = vlaneseq
        %v2142 = vshrl.u32 %v2141, 7
        %v2143 = vsub.s32 1, %v2142
        %v2144 = vrot.slane %v2070, %v2143
        %v2145 = vlaneseq
        %v2146 = vshrl.u32 %v2145, 7
        %v2147 = vsub.s32 1, %v2146
        %v2148 = vrot.slane %v2069, %v2147
        %v2149 = vlaneseq
        %v2150 = vshrl.u32 %v2149, 7
        %v2151 = vsub.s32 1, %v2150
        %v2152 = vrot.slane %v2071, %v2151
        %v2153 = vsel %vm839, %v2128, %v2124
        %v2154 = vsel %vm839, %v2136, %v2132
        %v2155 = vsel %vm839, %v2144, %v2140
        %v2156 = vsel %vm839, %v2152, %v2148
        %vm2161 = vcmask 256001
        %2162 = vst.msk [vmem:[#allocation3] sm:$0x6] %vm2161, %v2153
        %2163 = vst.msk [vmem:[#allocation3 + $0x10] sm:$0x6] %vm2161, %v2154
        %2164 = vst.msk [vmem:[#allocation3 + $0x20] sm:$0x6] %vm2161, %v2155
        %2165 = vst.msk [vmem:[#allocation3 + $0x30] sm:$0x6] %vm2161, %v2156
        %v2166 = vld [vmem:[#allocation2] sm:$0x3]
        %v2167 = vld [vmem:[#allocation2 + $0x10] sm:$0x3]
        %v2168 = vld [vmem:[#allocation2 + $0x20] sm:$0x3]
        %v2169 = vld [vmem:[#allocation2 + $0x30] sm:$0x3]
        %v2170 = vld [vmem:[#allocation3 + $0x1] sm:$0x3]
        %v2171 = vld [vmem:[#allocation3 + $0x11] sm:$0x3]
        %v2172 = vld [vmem:[#allocation3 + $0x21] sm:$0x3]
        %v2173 = vld [vmem:[#allocation3 + $0x31] sm:$0x3]
        %v2174 = vld [vmem:[#allocation3] sm:$0x3]
        %v2175 = vld [vmem:[#allocation3 + $0x10] sm:$0x3]
        %v2176 = vld [vmem:[#allocation3 + $0x20] sm:$0x3]
        %v2177 = vld [vmem:[#allocation3 + $0x30] sm:$0x3]
        %v2182 = vcombine.low %v2174, %v2175
        %v2183 = vcombine.low %v2176, %v2177
        %v2185 = vunpack.c.l.s4 1983009808
        %v2186 = vunpack.c.0.s8 %v2185
        %v2187 = vlaneseq
        %v2188 = vshrl.u32 %v2187, 7
        %v2189 = vsub.s32 %v2186, %v2188
        %v2190 = vrot.slane %v2182, %v2189
        %v2192 = vunpack.c.l.s4 1983009808
        %v2193 = vunpack.c.0.s8 %v2192
        %v2194 = vlaneseq
        %v2195 = vshrl.u32 %v2194, 7
        %v2196 = vsub.s32 %v2193, %v2195
        %v2197 = vrot.slane %v2183, %v2196
        %v2198 = vcombine.low %v2190, %v2197
        %v2200 = vpack.c.bf16 %v2198, %v2198
        %v2201 = vld [vmem:[#allocation2 + $0x1] sm:$0x3]
        %v2202 = vld [vmem:[#allocation2 + $0x11] sm:$0x3]
        %v2203 = vld [vmem:[#allocation2 + $0x21] sm:$0x3]
        %v2204 = vld [vmem:[#allocation2 + $0x31] sm:$0x3]
        %v2209 = vcombine.low %v2201, %v2202
        %v2210 = vcombine.low %v2203, %v2204
        %v2212 = vunpack.c.l.s4 1983009808
        %v2213 = vunpack.c.0.s8 %v2212
        %v2214 = vlaneseq
        %v2215 = vshrl.u32 %v2214, 7
        %v2216 = vsub.s32 %v2213, %v2215
        %v2217 = vrot.slane %v2209, %v2216
        %v2219 = vunpack.c.l.s4 1983009808
        %v2220 = vunpack.c.0.s8 %v2219
        %v2221 = vlaneseq
        %v2222 = vshrl.u32 %v2221, 7
        %v2223 = vsub.s32 %v2220, %v2222
        %v2224 = vrot.slane %v2210, %v2223
        %v2225 = vcombine.low %v2217, %v2224
        %v2227 = vpack.c.bf16 %v2225, %v2225
        %s2228 = scalar_lea.vmem [#allocation4], 128
        %v2229 = vld [vmem:[%s2228] sm:$0xf]
        %v2230 = vld [vmem:[%s2228 + $0x4] sm:$0xf]
        %v2231 = vld [vmem:[%s2228 + $0x8] sm:$0xf]
        %v2232 = vld [vmem:[%s2228 + $0xc] sm:$0xf]
        %v2237 = vcombine.low %v2166, %v2167
        %v2238 = vcombine.low %v2168, %v2169
        %v2240 = vunpack.c.l.s4 1983009808
        %v2241 = vunpack.c.0.s8 %v2240
        %v2242 = vlaneseq
        %v2243 = vshrl.u32 %v2242, 7
        %v2244 = vsub.s32 %v2241, %v2243
        %v2245 = vrot.slane %v2237, %v2244
        %v2247 = vunpack.c.l.s4 1983009808
        %v2248 = vunpack.c.0.s8 %v2247
        %v2249 = vlaneseq
        %v2250 = vshrl.u32 %v2249, 7
        %v2251 = vsub.s32 %v2248, %v2250
        %v2252 = vrot.slane %v2238, %v2251
        %v2253 = vcombine.low %v2245, %v2252
        %v2255 = vpack.c.bf16 %v2253, %v2253
        %s2256 = scalar_lea.vmem [#allocation4], 144
        %v2257 = vld [vmem:[%s2256] sm:$0xf]
        %v2258 = vld [vmem:[%s2256 + $0x4] sm:$0xf]
        %v2259 = vld [vmem:[%s2256 + $0x8] sm:$0xf]
        %v2260 = vld [vmem:[%s2256 + $0xc] sm:$0xf]
        %v2265 = vunpack.c.l.b16 %v2257
        %v2266 = vunpack.c.l.b16 %v2258
        %v2267 = vunpack.c.l.b16 %v2259
        %v2268 = vunpack.c.l.b16 %v2260
        %v2269 = vpack.c.b16 %v2266, %v2265
        %v2270 = vpack.c.b16 %v2268, %v2267
        %v2274 = vsel %vm876, %v2255, 0
        %2276 = vmatprep.subr.bf16.mxu0 0
        %2277 = vmatpush1.bf16.msra.mxu0 %v2269
        %2278 = vmatprep.subr.bf16.mxu0 0
        %2279 = vmatpush1.bf16.msra.mxu0 %v2270
        %2280 = vmatprep.subr.bf16.mxu0 0
        %2281 = vmatpush1.bf16.msra.mxu0 0
        %2282 = vmatprep.subr.bf16.mxu0 0
        %2283 = vmatpush1.bf16.msra.mxu0 0
        %2284 = vmatprep.subr.bf16.mxu0 0
        %2285 = vmatpush1.bf16.msra.mxu0 0
        %2286 = vmatprep.subr.bf16.mxu0 0
        %2287 = vmatpush1.bf16.msra.mxu0 0
        %2288 = vmatprep.subr.bf16.mxu0 0
        %2289 = vmatpush1.bf16.msra.mxu0 0
        %2290 = vmatprep.subr.bf16.mxu0 0
        %2291 = vmatpush1.bf16.msra.mxu0 0
        %2292 = vmatprep.subr.bf16.mxu0 0
        %2293 = vmatpush1.bf16.msra.mxu0 0
        %2294 = vmatprep.subr.bf16.mxu0 0
        %2295 = vmatpush1.bf16.msra.mxu0 0
        %2296 = vmatprep.subr.bf16.mxu0 0
        %2297 = vmatpush1.bf16.msra.mxu0 0
        %2298 = vmatprep.subr.bf16.mxu0 0
        %2299 = vmatpush1.bf16.msra.mxu0 0
        %2300 = vmatprep.subr.bf16.mxu0 0
        %2301 = vmatpush1.bf16.msra.mxu0 0
        %2302 = vmatprep.subr.bf16.mxu0 0
        %2303 = vmatpush1.bf16.msra.mxu0 0
        %2304 = vmatprep.subr.bf16.mxu0 0
        %2305 = vmatpush1.bf16.msra.mxu0 0
        %2306 = vmatprep.subr.bf16.mxu0 0
        %2307 = vmatpush1.bf16.msra.mxu0 0
        %2308 = vmatprep.mubr.bf16.mxu0 0
        %2309 = vmatmul.mubr.bf16.gmra.mrb[0].mxu0 %v2274
        %v2310 = vpop.f32.mrb[0].mxu0
        %v2311 = vadd.f32 0.0, %v2310
        %v2312 = vpop.f32.mrb[0].mxu0
        %v2313 = vpop.f32.mrb[0].mxu0
        %v2314 = vpop.f32.mrb[0].mxu0
        %2315 = vdwg.mxu0
        %v2320 = vunpack.c.l.b16 %v2229
        %v2321 = vunpack.c.l.b16 %v2230
        %v2322 = vunpack.c.l.b16 %v2231
        %v2323 = vunpack.c.l.b16 %v2232
        %v2324 = vpack.c.b16 %v2321, %v2320
        %v2325 = vpack.c.b16 %v2323, %v2322
        %v2329 = vsel %vm876, %v2200, 0
        %2331 = vmatprep.subr.bf16.mxu0 0
        %2332 = vmatpush1.bf16.msra.mxu0 %v2324
        %2333 = vmatprep.subr.bf16.mxu0 0
        %2334 = vmatpush1.bf16.msra.mxu0 %v2325
        %2335 = vmatprep.subr.bf16.mxu0 0
        %2336 = vmatpush1.bf16.msra.mxu0 0
        %2337 = vmatprep.subr.bf16.mxu0 0
        %2338 = vmatpush1.bf16.msra.mxu0 0
        %2339 = vmatprep.subr.bf16.mxu0 0
        %2340 = vmatpush1.bf16.msra.mxu0 0
        %2341 = vmatprep.subr.bf16.mxu0 0
        %2342 = vmatpush1.bf16.msra.mxu0 0
        %2343 = vmatprep.subr.bf16.mxu0 0
        %2344 = vmatpush1.bf16.msra.mxu0 0
        %2345 = vmatprep.subr.bf16.mxu0 0
        %2346 = vmatpush1.bf16.msra.mxu0 0
        %2347 = vmatprep.subr.bf16.mxu0 0
        %2348 = vmatpush1.bf16.msra.mxu0 0
        %2349 = vmatprep.subr.bf16.mxu0 0
        %2350 = vmatpush1.bf16.msra.mxu0 0
        %2351 = vmatprep.subr.bf16.mxu0 0
        %2352 = vmatpush1.bf16.msra.mxu0 0
        %2353 = vmatprep.subr.bf16.mxu0 0
        %2354 = vmatpush1.bf16.msra.mxu0 0
        %2355 = vmatprep.subr.bf16.mxu0 0
        %2356 = vmatpush1.bf16.msra.mxu0 0
        %2357 = vmatprep.subr.bf16.mxu0 0
        %2358 = vmatpush1.bf16.msra.mxu0 0
        %2359 = vmatprep.subr.bf16.mxu0 0
        %2360 = vmatpush1.bf16.msra.mxu0 0
        %2361 = vmatprep.subr.bf16.mxu0 0
        %2362 = vmatpush1.bf16.msra.mxu0 0
        %2363 = vmatprep.mubr.bf16.mxu0 0
        %2364 = vmatmul.mubr.bf16.gmra.mrb[0].mxu0 %v2329
        %v2365 = vpop.f32.mrb[0].mxu0
        %v2366 = vadd.f32 %v2311, %v2365
        %v2367 = vpop.f32.mrb[0].mxu0
        %v2368 = vpop.f32.mrb[0].mxu0
        %v2369 = vpop.f32.mrb[0].mxu0
        %2370 = vdwg.mxu0
        %v2375 = vcombine.low %v2170, %v2171
        %v2376 = vcombine.low %v2172, %v2173
        %v2378 = vunpack.c.l.s4 1983009808
        %v2379 = vunpack.c.0.s8 %v2378
        %v2380 = vlaneseq
        %v2381 = vshrl.u32 %v2380, 7
        %v2382 = vsub.s32 %v2379, %v2381
        %v2383 = vrot.slane %v2375, %v2382
        %v2385 = vunpack.c.l.s4 1983009808
        %v2386 = vunpack.c.0.s8 %v2385
        %v2387 = vlaneseq
        %v2388 = vshrl.u32 %v2387, 7
        %v2389 = vsub.s32 %v2386, %v2388
        %v2390 = vrot.slane %v2376, %v2389
        %v2391 = vcombine.low %v2383, %v2390
        %v2393 = vpack.c.bf16 %v2391, %v2391
        %s2394 = scalar_lea.vmem [#allocation4], 160
        %v2395 = vld [vmem:[%s2394] sm:$0xf]
        %v2396 = vld [vmem:[%s2394 + $0x4] sm:$0xf]
        %v2397 = vld [vmem:[%s2394 + $0x8] sm:$0xf]
        %v2398 = vld [vmem:[%s2394 + $0xc] sm:$0xf]
        %v2403 = vunpack.c.l.b16 %v2395
        %v2404 = vunpack.c.l.b16 %v2396
        %v2405 = vunpack.c.l.b16 %v2397
        %v2406 = vunpack.c.l.b16 %v2398
        %v2407 = vpack.c.b16 %v2404, %v2403
        %v2408 = vpack.c.b16 %v2406, %v2405
        %v2412 = vsel %vm876, %v2393, 0
        %2414 = vmatprep.subr.bf16.mxu0 0
        %2415 = vmatpush1.bf16.msra.mxu0 %v2407
        %2416 = vmatprep.subr.bf16.mxu0 0
        %2417 = vmatpush1.bf16.msra.mxu0 %v2408
        %2418 = vmatprep.subr.bf16.mxu0 0
        %2419 = vmatpush1.bf16.msra.mxu0 0
        %2420 = vmatprep.subr.bf16.mxu0 0
        %2421 = vmatpush1.bf16.msra.mxu0 0
        %2422 = vmatprep.subr.bf16.mxu0 0
        %2423 = vmatpush1.bf16.msra.mxu0 0
        %2424 = vmatprep.subr.bf16.mxu0 0
        %2425 = vmatpush1.bf16.msra.mxu0 0
        %2426 = vmatprep.subr.bf16.mxu0 0
        %2427 = vmatpush1.bf16.msra.mxu0 0
        %2428 = vmatprep.subr.bf16.mxu0 0
        %2429 = vmatpush1.bf16.msra.mxu0 0
        %2430 = vmatprep.subr.bf16.mxu0 0
        %2431 = vmatpush1.bf16.msra.mxu0 0
        %2432 = vmatprep.subr.bf16.mxu0 0
        %2433 = vmatpush1.bf16.msra.mxu0 0
        %2434 = vmatprep.subr.bf16.mxu0 0
        %2435 = vmatpush1.bf16.msra.mxu0 0
        %2436 = vmatprep.subr.bf16.mxu0 0
        %2437 = vmatpush1.bf16.msra.mxu0 0
        %2438 = vmatprep.subr.bf16.mxu0 0
        %2439 = vmatpush1.bf16.msra.mxu0 0
        %2440 = vmatprep.subr.bf16.mxu0 0
        %2441 = vmatpush1.bf16.msra.mxu0 0
        %2442 = vmatprep.subr.bf16.mxu0 0
        %2443 = vmatpush1.bf16.msra.mxu0 0
        %2444 = vmatprep.subr.bf16.mxu0 0
        %2445 = vmatpush1.bf16.msra.mxu0 0
        %2446 = vmatprep.mubr.bf16.mxu0 0
        %2447 = vmatmul.mubr.bf16.gmra.mrb[0].mxu0 %v2412
        %v2448 = vpop.f32.mrb[0].mxu0
        %v2449 = vadd.f32 0.0, %v2448
        %v2450 = vpop.f32.mrb[0].mxu0
        %v2451 = vpop.f32.mrb[0].mxu0
        %v2452 = vpop.f32.mrb[0].mxu0
        %2453 = vdwg.mxu0
        %v2454 = vadd.f32 %v2366, %v2449
        %s2455 = scalar_lea.vmem [#allocation4], 176
        %v2456 = vld [vmem:[%s2455] sm:$0xf]
        %v2457 = vld [vmem:[%s2455 + $0x4] sm:$0xf]
        %v2458 = vld [vmem:[%s2455 + $0x8] sm:$0xf]
        %v2459 = vld [vmem:[%s2455 + $0xc] sm:$0xf]
        %v2464 = vunpack.c.l.b16 %v2456
        %v2465 = vunpack.c.l.b16 %v2457
        %v2466 = vunpack.c.l.b16 %v2458
        %v2467 = vunpack.c.l.b16 %v2459
        %v2468 = vpack.c.b16 %v2465, %v2464
        %v2469 = vpack.c.b16 %v2467, %v2466
        %v2473 = vsel %vm876, %v2227, 0
        %2475 = vmatprep.subr.bf16.mxu0 0
        %2476 = vmatpush1.bf16.msra.mxu0 %v2468
        %2477 = vmatprep.subr.bf16.mxu0 0
        %2478 = vmatpush1.bf16.msra.mxu0 %v2469
        %2479 = vmatprep.subr.bf16.mxu0 0
        %2480 = vmatpush1.bf16.msra.mxu0 0
        %2481 = vmatprep.subr.bf16.mxu0 0
        %2482 = vmatpush1.bf16.msra.mxu0 0
        %2483 = vmatprep.subr.bf16.mxu0 0
        %2484 = vmatpush1.bf16.msra.mxu0 0
        %2485 = vmatprep.subr.bf16.mxu0 0
        %2486 = vmatpush1.bf16.msra.mxu0 0
        %2487 = vmatprep.subr.bf16.mxu0 0
        %2488 = vmatpush1.bf16.msra.mxu0 0
        %2489 = vmatprep.subr.bf16.mxu0 0
        %2490 = vmatpush1.bf16.msra.mxu0 0
        %2491 = vmatprep.subr.bf16.mxu0 0
        %2492 = vmatpush1.bf16.msra.mxu0 0
        %2493 = vmatprep.subr.bf16.mxu0 0
        %2494 = vmatpush1.bf16.msra.mxu0 0
        %2495 = vmatprep.subr.bf16.mxu0 0
        %2496 = vmatpush1.bf16.msra.mxu0 0
        %2497 = vmatprep.subr.bf16.mxu0 0
        %2498 = vmatpush1.bf16.msra.mxu0 0
        %2499 = vmatprep.subr.bf16.mxu0 0
        %2500 = vmatpush1.bf16.msra.mxu0 0
        %2501 = vmatprep.subr.bf16.mxu0 0
        %2502 = vmatpush1.bf16.msra.mxu0 0
        %2503 = vmatprep.subr.bf16.mxu0 0
        %2504 = vmatpush1.bf16.msra.mxu0 0
        %2505 = vmatprep.subr.bf16.mxu0 0
        %2506 = vmatpush1.bf16.msra.mxu0 0
        %2507 = vmatprep.mubr.bf16.mxu0 0
        %2508 = vmatmul.mubr.bf16.gmra.mrb[0].mxu0 %v2473
        %v2509 = vpop.f32.mrb[0].mxu0
        %v2510 = vadd.f32 0.0, %v2509
        %v2511 = vpop.f32.mrb[0].mxu0
        %v2512 = vpop.f32.mrb[0].mxu0
        %v2513 = vpop.f32.mrb[0].mxu0
        %2514 = vdwg.mxu0
        %v2515 = vadd.f32 %v2454, %v2510
        %s2516 = scalar_lea.vmem %s4, 2
        %v2517 = vld [vmem:[%s2516] sm:$0x1]
        %v2519 = vlaneseq
        %v2520 = vshrl.u32 %v2519, 7
        %v2521 = vsub.s32 0, %v2520
        %v2522 = vrot.slane %v2517, %v2521
        %v2524 = vadd.f32 %v2515, %v2522
        %v2525 = vadd.f32 %v2166, %v2170
        %v2526 = vadd.f32 %v2167, %v2171
        %v2527 = vadd.f32 %v2168, %v2172
        %v2528 = vadd.f32 %v2169, %v2173
        %v2529 = vmul.f32 %v2525, 0.5
        %v2530 = vmul.f32 %v2526, 0.5
        %v2531 = vmul.f32 %v2527, 0.5
        %v2532 = vmul.f32 %v2528, 0.5
        %v2533 = vxor.u32 %v2524, 2147483648
        %v2534 = vmul.f32 %v2533, 1.442695
        %v2535 = vpow.pop %v2534
        %v2536 = vadd.f32 %v2535, 1.0
        %v2537 = vrcp.pop %v2536
        %v2538 = vmul.f32 1.0, %v2537
        %2540 = vrot.lane.b32.xlu0 %v2538, 96
        %v2541 = vpop.permute.xlu0 %2540
        %v2543 = vmul.f32 %v2524, %v2541
        %v2548 = vcombine.low %v2529, %v2530
        %v2549 = vcombine.low %v2531, %v2532
        %v2551 = vunpack.c.l.s4 1983009808
        %v2552 = vunpack.c.0.s8 %v2551
        %v2553 = vlaneseq
        %v2554 = vshrl.u32 %v2553, 7
        %v2555 = vsub.s32 %v2552, %v2554
        %v2556 = vrot.slane %v2548, %v2555
        %v2558 = vunpack.c.l.s4 1983009808
        %v2559 = vunpack.c.0.s8 %v2558
        %v2560 = vlaneseq
        %v2561 = vshrl.u32 %v2560, 7
        %v2562 = vsub.s32 %v2559, %v2561
        %v2563 = vrot.slane %v2549, %v2562
        %v2564 = vcombine.low %v2556, %v2563
        %v2566 = vadd.f32 %v2543, %v2564
        %v2568 = vcombine.high %v2566, %v2566
        %v2570 = vunpack.c.l.s4 1983009808
        %v2571 = vunpack.c.0.s8 %v2570
        %v2572 = vlaneseq
        %v2573 = vshrl.u32 %v2572, 7
        %v2574 = vsub.s32 %v2571, %v2573
        %v2575 = vrot.slane %v2566, %v2574
        %v2577 = vunpack.c.l.s4 1983009808
        %v2578 = vunpack.c.0.s8 %v2577
        %v2579 = vlaneseq
        %v2580 = vshrl.u32 %v2579, 7
        %v2581 = vsub.s32 %v2578, %v2580
        %v2582 = vrot.slane %v2568, %v2581
        %v2583 = vcombine.high %v2575, %v2575
        %v2584 = vcombine.high %v2582, %v2582
        %2589 = vxpose.xlu0.b32.start [1/16] %v2575, 128
        %2590 = vxpose.xlu0.b32.cont [2/16] 0.0, 128
        %2591 = vxpose.xlu0.b32.cont [3/16] 0.0, 128
        %2592 = vxpose.xlu0.b32.cont [4/16] 0.0, 128
        %2593 = vxpose.xlu0.b32.cont [5/16] 0.0, 128
        %2594 = vxpose.xlu0.b32.cont [6/16] 0.0, 128
        %2595 = vxpose.xlu0.b32.cont [7/16] 0.0, 128
        %2596 = vxpose.xlu0.b32.cont [8/16] 0.0, 128
        %2597 = vxpose.xlu0.b32.cont [9/16] 0.0, 128
        %2598 = vxpose.xlu0.b32.cont [10/16] 0.0, 128
        %2599 = vxpose.xlu0.b32.cont [11/16] 0.0, 128
        %2600 = vxpose.xlu0.b32.cont [12/16] 0.0, 128
        %2601 = vxpose.xlu0.b32.cont [13/16] 0.0, 128
        %2602 = vxpose.xlu0.b32.cont [14/16] 0.0, 128
        %2603 = vxpose.xlu0.b32.cont [15/16] 0.0, 128
        %2604 = vxpose.xlu0.b32.end [16/16] 0.0, 128
        %v2605 = vpop.trf.xlu0
        %v2606 = vpop.trf.xlu0
        %v2607 = vpop.trf.xlu0
        %v2608 = vpop.trf.xlu0
        %v2609 = vpop.trf.xlu0
        %v2610 = vpop.trf.xlu0
        %v2611 = vpop.trf.xlu0
        %v2612 = vpop.trf.xlu0
        %v2613 = vpop.trf.xlu0
        %v2614 = vpop.trf.xlu0
        %v2615 = vpop.trf.xlu0
        %v2616 = vpop.trf.xlu0
        %v2617 = vpop.trf.xlu0
        %v2618 = vpop.trf.xlu0
        %v2619 = vpop.trf.xlu0
        %v2620 = vpop.trf.xlu0
        %2621 = vxpose.xlu0.b32.start [1/16] %v2583, 128
        %2622 = vxpose.xlu0.b32.cont [2/16] 0.0, 128
        %2623 = vxpose.xlu0.b32.cont [3/16] 0.0, 128
        %2624 = vxpose.xlu0.b32.cont [4/16] 0.0, 128
        %2625 = vxpose.xlu0.b32.cont [5/16] 0.0, 128
        %2626 = vxpose.xlu0.b32.cont [6/16] 0.0, 128
        %2627 = vxpose.xlu0.b32.cont [7/16] 0.0, 128
        %2628 = vxpose.xlu0.b32.cont [8/16] 0.0, 128
        %2629 = vxpose.xlu0.b32.cont [9/16] 0.0, 128
        %2630 = vxpose.xlu0.b32.cont [10/16] 0.0, 128
        %2631 = vxpose.xlu0.b32.cont [11/16] 0.0, 128
        %2632 = vxpose.xlu0.b32.cont [12/16] 0.0, 128
        %2633 = vxpose.xlu0.b32.cont [13/16] 0.0, 128
        %2634 = vxpose.xlu0.b32.cont [14/16] 0.0, 128
        %2635 = vxpose.xlu0.b32.cont [15/16] 0.0, 128
        %2636 = vxpose.xlu0.b32.end [16/16] 0.0, 128
        %v2637 = vpop.trf.xlu0
        %v2638 = vpop.trf.xlu0
        %v2639 = vpop.trf.xlu0
        %v2640 = vpop.trf.xlu0
        %v2641 = vpop.trf.xlu0
        %v2642 = vpop.trf.xlu0
        %v2643 = vpop.trf.xlu0
        %v2644 = vpop.trf.xlu0
        %v2645 = vpop.trf.xlu0
        %v2646 = vpop.trf.xlu0
        %v2647 = vpop.trf.xlu0
        %v2648 = vpop.trf.xlu0
        %v2649 = vpop.trf.xlu0
        %v2650 = vpop.trf.xlu0
        %v2651 = vpop.trf.xlu0
        %v2652 = vpop.trf.xlu0
        %2653 = vxpose.xlu0.b32.start [1/16] %v2582, 128
        %2654 = vxpose.xlu0.b32.cont [2/16] 0.0, 128
        %2655 = vxpose.xlu0.b32.cont [3/16] 0.0, 128
        %2656 = vxpose.xlu0.b32.cont [4/16] 0.0, 128
        %2657 = vxpose.xlu0.b32.cont [5/16] 0.0, 128
        %2658 = vxpose.xlu0.b32.cont [6/16] 0.0, 128
        %2659 = vxpose.xlu0.b32.cont [7/16] 0.0, 128
        %2660 = vxpose.xlu0.b32.cont [8/16] 0.0, 128
        %2661 = vxpose.xlu0.b32.cont [9/16] 0.0, 128
        %2662 = vxpose.xlu0.b32.cont [10/16] 0.0, 128
        %2663 = vxpose.xlu0.b32.cont [11/16] 0.0, 128
        %2664 = vxpose.xlu0.b32.cont [12/16] 0.0, 128
        %2665 = vxpose.xlu0.b32.cont [13/16] 0.0, 128
        %2666 = vxpose.xlu0.b32.cont [14/16] 0.0, 128
        %2667 = vxpose.xlu0.b32.cont [15/16] 0.0, 128
        %2668 = vxpose.xlu0.b32.end [16/16] 0.0, 128
        %v2669 = vpop.trf.xlu0
        %v2670 = vpop.trf.xlu0
        %v2671 = vpop.trf.xlu0
        %v2672 = vpop.trf.xlu0
        %v2673 = vpop.trf.xlu0
        %v2674 = vpop.trf.xlu0
        %v2675 = vpop.trf.xlu0
        %v2676 = vpop.trf.xlu0
        %v2677 = vpop.trf.xlu0
        %v2678 = vpop.trf.xlu0
        %v2679 = vpop.trf.xlu0
        %v2680 = vpop.trf.xlu0
        %v2681 = vpop.trf.xlu0
        %v2682 = vpop.trf.xlu0
        %v2683 = vpop.trf.xlu0
        %v2684 = vpop.trf.xlu0
        %2685 = vxpose.xlu0.b32.start [1/16] %v2584, 128
        %2686 = vxpose.xlu0.b32.cont [2/16] 0.0, 128
        %2687 = vxpose.xlu0.b32.cont [3/16] 0.0, 128
        %2688 = vxpose.xlu0.b32.cont [4/16] 0.0, 128
        %2689 = vxpose.xlu0.b32.cont [5/16] 0.0, 128
        %2690 = vxpose.xlu0.b32.cont [6/16] 0.0, 128
        %2691 = vxpose.xlu0.b32.cont [7/16] 0.0, 128
        %2692 = vxpose.xlu0.b32.cont [8/16] 0.0, 128
        %2693 = vxpose.xlu0.b32.cont [9/16] 0.0, 128
        %2694 = vxpose.xlu0.b32.cont [10/16] 0.0, 128
        %2695 = vxpose.xlu0.b32.cont [11/16] 0.0, 128
        %2696 = vxpose.xlu0.b32.cont [12/16] 0.0, 128
        %2697 = vxpose.xlu0.b32.cont [13/16] 0.0, 128
        %2698 = vxpose.xlu0.b32.cont [14/16] 0.0, 128
        %2699 = vxpose.xlu0.b32.cont [15/16] 0.0, 128
        %2700 = vxpose.xlu0.b32.end [16/16] 0.0, 128
        %v2701 = vpop.trf.xlu0
        %v2702 = vpop.trf.xlu0
        %v2703 = vpop.trf.xlu0
        %v2704 = vpop.trf.xlu0
        %v2705 = vpop.trf.xlu0
        %v2706 = vpop.trf.xlu0
        %v2707 = vpop.trf.xlu0
        %v2708 = vpop.trf.xlu0
        %v2709 = vpop.trf.xlu0
        %v2710 = vpop.trf.xlu0
        %v2711 = vpop.trf.xlu0
        %v2712 = vpop.trf.xlu0
        %v2713 = vpop.trf.xlu0
        %v2714 = vpop.trf.xlu0
        %v2715 = vpop.trf.xlu0
        %v2716 = vpop.trf.xlu0
        %vm2717 = vcmask 15360
        %2718 = vst.msk [vmem:[%s243] sm:$0xff] %vm2717, %v2605
        %2719 = vst.msk [vmem:[%s243 + $0x8] sm:$0xff] %vm2717, %v2606
        %2720 = vst.msk [vmem:[%s243 + $0x10] sm:$0xff] %vm2717, %v2607
        %2721 = vst.msk [vmem:[%s243 + $0x18] sm:$0xff] %vm2717, %v2608
        %2722 = vst.msk [vmem:[%s243 + $0x20] sm:$0xff] %vm2717, %v2637
        %2723 = vst.msk [vmem:[%s243 + $0x28] sm:$0xff] %vm2717, %v2638
        %2724 = vst.msk [vmem:[%s243 + $0x30] sm:$0xff] %vm2717, %v2639
        %2725 = vst.msk [vmem:[%s243 + $0x38] sm:$0xff] %vm2717, %v2640
        %2726 = vst.msk [vmem:[%s243 + $0x40] sm:$0xff] %vm2717, %v2669
        %2727 = vst.msk [vmem:[%s243 + $0x48] sm:$0xff] %vm2717, %v2670
        %2728 = vst.msk [vmem:[%s243 + $0x50] sm:$0xff] %vm2717, %v2671
        %2729 = vst.msk [vmem:[%s243 + $0x58] sm:$0xff] %vm2717, %v2672
        %2730 = vst.msk [vmem:[%s243 + $0x60] sm:$0xff] %vm2717, %v2701
        %2731 = vst.msk [vmem:[%s243 + $0x68] sm:$0xff] %vm2717, %v2702
        %2732 = vst.msk [vmem:[%s243 + $0x70] sm:$0xff] %vm2717, %v2703
        %2733 = vst.msk [vmem:[%s243 + $0x78] sm:$0xff] %vm2717, %v2704
        %s2734 = smul.u32 4, %s17
        %p2735 = scmp.lt.s32.totalorder %s2734, 7
        %s2736 = scalar_select %p2735, %s2734, 7
        %s2737 = smul.addr %s2736, 4
        %s2738 = smul.addr %s2737, 8
        %s2739 = scalar_lea.vmem %s5, %s2738
        // Predicated region
        $region45: #{tpu_custom_call.1} parent=39 // pred_check
          %p2740 = pneg %p145
        $region46: #{tpu_custom_call.1} parent=39 // pred_check_branch
          %2742 = sbr.rel (%p2740) target = $region48
        $region47: #{tpu_custom_call.1} parent=39 // pred_region
          %s2743 = smul.u32 4, %s17
        $region48: #{tpu_custom_call.1} parent=39 // pred_fallthru
          _
      $region40: #{tpu_custom_call.1} parent=5 // pred_fallthru
        _
      %p2744 = scmp.le.s32.totalorder 2, %s12
      // Predicated region
      $region49: #{tpu_custom_call.1} parent=5 // pred_check
        %p2745 = pneg %p2744
      $region50: #{tpu_custom_call.1} parent=5 // pred_check_branch
        %2747 = sbr.rel (%p2745) target = $region52
      $region51: #{tpu_custom_call.1} parent=5 // pred_region
        %s2748 = ssub.s32 %s12, 2
        // Predicated region
        $region53: #{tpu_custom_call.1} parent=51 // pred_check
          %p2749 = pneg %p151
        $region54: #{tpu_custom_call.1} parent=51 // pred_check_branch
          %2751 = sbr.rel (%p2749) target = $region56
        $region55: #{tpu_custom_call.1} parent=51 // pred_region
          %s2752 = smul.u32 4, %s18
          %p2753 = scmp.lt.s32.totalorder %s2752, 7
          %s2754 = scalar_select %p2753, %s2752, 7
          %s2755 = smul.addr %s2754, 4
          %s2756 = smul.addr %s2755, 8
          %s2757 = scalar_lea.vmem %s5, %s2756
        $region56: #{tpu_custom_call.1} parent=51 // pred_fallthru
          _
      $region52: #{tpu_custom_call.1} parent=5 // pred_fallthru
        _
    $region6: #{tpu_custom_call.1} parent=1 // loop_footer
      %s16 = sadd.s32 1, %s12
    $region7: #{tpu_custom_call.1} parent=1 // loop_footer_branch
      %11 = sbr.rel target = $region3
    $region8: #{tpu_custom_call.1} parent=1 // loop_exit
      _
    %2758 = vsyncpa [#allocation5], 1
    %s2759 = scalar_lea.sflag [#allocation5], 1
    %2760 = vsyncpa %s2759, 1

</llo_original>
